<compile_context>
chip_gen: v6e
topology: v6e:2x2x1
jax: 0.10.0
libtpu: 0.0.40
codegen_flags: <defaults>
</compile_context>

<pallas_src>
import functools

import jax
import jax.numpy as jnp
from jax.experimental import pallas as pl
from jax.experimental.pallas import tpu as pltpu

EPS = 1e-5  # torch.nn.LayerNorm default


def _layer_norm(h, gamma, beta):
    # h: (N, E), gamma/beta: (1, E)
    mean = jnp.mean(h, axis=-1, keepdims=True)
    var = jnp.mean((h - mean) ** 2, axis=-1, keepdims=True)
    return (h - mean) * jax.lax.rsqrt(var + EPS) * gamma + beta


def _transformer_comb_kernel(
    x_ref,        # (N, E)  f32, rows ordered s*B + b
    wqkv_ref,     # (E, 3E) f32, fused [wq/sqrt(E) | wk | wv]
    bqkv_ref,     # (1, 3E) f32
    wo_ref,       # (E, E)  f32
    bo_ref,       # (1, E)  f32
    g1_ref,       # (1, E)  f32  LayerNorm1 gamma
    be1_ref,      # (1, E)  f32  LayerNorm1 beta
    w1_ref,       # (E, F)  bf16 FFN up
    b1_ref,       # (1, F)  f32
    w2t_ref,      # (E, F)  bf16 FFN down, stored TRANSPOSED (lane-dense along F)
    b2_ref,       # (1, E)  f32
    gw_ref,       # (1, E)  f32  = g2 * wlw    (LN2 gamma folded with Linear(E,1))
    c0_ref,       # (1, 1)  f32  = sum(be2*wlw) + blw   (SMEM scalar)
    out_ref,      # (N, 1)  f32  logits, row order s*B + b
    *, batch):
    N, E = x_ref.shape
    x = x_ref[...]

    # ---- fused QKV projection (softmax scale pre-folded into the Q columns) ----
    qkv = jnp.dot(x, wqkv_ref[...], preferred_element_type=jnp.float32) + bqkv_ref[...]
    q = qkv[:, :E]
    k = qkv[:, E:2 * E]
    v = qkv[:, 2 * E:]

    # ---- flat (N, N) single-head attention with block-diagonal mask ----
    # rows r, c may attend iff they belong to the same transformer batch,
    # i.e. (r % batch) == (c % batch)   (row order is s*B + b).
    scores = jax.lax.dot_general(q, k, (((1,), (1,)), ((), ())),
                                 preferred_element_type=jnp.float32)      # q @ k.T
    row = jax.lax.broadcasted_iota(jnp.int32, (N, N), 0)
    col = jax.lax.broadcasted_iota(jnp.int32, (N, N), 1)
    scores = jnp.where((row % batch) == (col % batch), scores, -1e30)     # mask BEFORE max
    m = jnp.max(scores, axis=-1, keepdims=True)
    p = jnp.exp(scores - m)
    attn = p * pl.reciprocal(jnp.sum(p, axis=-1, keepdims=True), approx=True)
    ctx = jnp.dot(attn, v, preferred_element_type=jnp.float32)            # (N, E)
    attn_out = (jnp.dot(ctx, wo_ref[...], preferred_element_type=jnp.float32)
                + bo_ref[...])

    # ---- residual + LayerNorm1 (post-norm, torch default) ----
    h1 = _layer_norm(x + attn_out, g1_ref[...], be1_ref[...])

    # ---- FFN (ReLU): bf16 MXU operands, f32 accumulation, f32 element-wise ----
    ff = (jnp.dot(h1.astype(jnp.bfloat16), w1_ref[...],
                  preferred_element_type=jnp.float32) + b1_ref[...])
    ff = jnp.maximum(ff, 0.0)
    # Down-projection with transposed weight (contract last dims, q@k.T pattern):
    #   (N, F) x (E, F) -> (N, E)
    y = (jax.lax.dot_general(ff.astype(jnp.bfloat16), w2t_ref[...],
                             (((1,), (1,)), ((), ())),
                             preferred_element_type=jnp.float32) + b2_ref[...])

    # ---- residual + LayerNorm2 folded with learned_weights Linear(E, 1) ----
    z = h1 + y
    mu = jnp.mean(z, axis=-1, keepdims=True)
    var = jnp.mean((z - mu) ** 2, axis=-1, keepdims=True)
    normed = (z - mu) * jax.lax.rsqrt(var + EPS)
    out_ref[...] = (jnp.sum(normed * gw_ref[...], axis=-1, keepdims=True)
                    + c0_ref[0, 0])


def prepare_params(params):
    """One-time wrapper-side fusion/folding (NOT per forward pass).

    NOTE: weights follow the y = x @ W convention (already transposed relative to
    torch's nn.Linear / in_proj storage).  When loading a real torch checkpoint,
    transpose the torch weights first.
    """
    (wq, wk, wv, bq, bk, bv, wo, bo, g1, be1,
     w1, b1, w2, b2, g2, be2, wlw, blw) = params
    E = wq.shape[0]
    assert wq.shape == (E, E) and wlw.shape == (1, E) and blw.shape == (1, 1)
    scale = 1.0 / (float(E) ** 0.5)                       # nhead=1 -> head_dim = E
    wqkv = jnp.concatenate([wq * scale, wk, wv], axis=1).astype(jnp.float32)  # (E, 3E)
    bqkv = jnp.concatenate([bq * scale, bk, bv], axis=1).astype(jnp.float32)  # (1, 3E)
    gw = (g2 * wlw).astype(jnp.float32)                                       # (1, E)
    c0 = (jnp.sum(be2 * wlw) + blw[0, 0]).reshape(1, 1).astype(jnp.float32)   # (1, 1)
    return (wqkv, bqkv, wo, bo, g1, be1,
            w1.astype(jnp.bfloat16), b1,
            jnp.transpose(w2).astype(jnp.bfloat16),   # (E, F): lane-dense, 8x smaller VMEM tile
            b2, gw, c0)


def transformer_combination_forward(teachers_outputs, prepped):
    """teachers_outputs: (E, S, B) f32 (the torch module's input layout).
    Returns logits of shape (S, B), matching torch's .squeeze() result."""
    E, S, B = teachers_outputs.shape
    N = S * B
    # torch: .permute(1, 2, 0) -> (S, B, E).  One wrapper transpose; flattening the
    # leading (S, B) dims gives row order s*B + b, so the kernel output is already in
    # (S, B) order and only needs a free reshape on the way out.
    x2d = jnp.transpose(teachers_outputs, (1, 2, 0)).reshape(N, E)

    out = pl.pallas_call(
        functools.partial(_transformer_comb_kernel, batch=B),
        out_shape=jax.ShapeDtypeStruct((N, 1), jnp.float32),
        in_specs=(
            [pl.BlockSpec(memory_space=pltpu.MemorySpace.VMEM)] * 12
            + [pl.BlockSpec(memory_space=pltpu.MemorySpace.SMEM)]
        ),
        out_specs=pl.BlockSpec(memory_space=pltpu.MemorySpace.VMEM),
    )(x2d, *prepped)
    return out.reshape(S, B)


def reference_forward(teachers_outputs, params, ffn_dtype=jnp.float32):
    """Pure-JAX reference mirroring torch semantics (per-batch attention over S,
    post-norm encoder layer, Linear(E,1) + squeeze).  `ffn_dtype=bfloat16` reproduces
    the kernel's bf16 FFN-matmul operands for a tight comparison."""
    (wq, wk, wv, bq, bk, bv, wo, bo, g1, be1,
     w1, b1, w2, b2, g2, be2, wlw, blw) = params
    E, S, B = teachers_outputs.shape
    x = jnp.transpose(teachers_outputs, (1, 2, 0))        # (S, B, E), like torch permute
    q = x @ wq + bq
    k = x @ wk + bk
    v = x @ wv + bv
    scores = jnp.einsum('sbe,tbe->bst', q, k) / (float(E) ** 0.5)
    attn = jax.nn.softmax(scores, axis=-1)
    ctx = jnp.einsum('bst,tbe->sbe', attn, v)
    x2 = x.reshape(S * B, E)
    attn_out = ctx.reshape(S * B, E) @ wo + bo
    h1 = _layer_norm(x2 + attn_out, g1, be1)
    ff = jnp.dot(h1.astype(ffn_dtype), w1.astype(ffn_dtype),
                 preferred_element_type=jnp.float32) + b1
    ff = jnp.maximum(ff, 0.0)
    y = jnp.dot(ff.astype(ffn_dtype), w2.astype(ffn_dtype),
                preferred_element_type=jnp.float32) + b2
    h2 = _layer_norm(h1 + y, g2, be2)
    logits = h2 @ wlw.T + blw[0, 0]                       # (S*B, 1)
    return logits.reshape(S, B)


def init_params(key, E, F):
    """Deterministic synthetic init of all module parameters (y = x @ W convention)."""
    ks = jax.random.split(key, 16)

    def rnd(k, shape, scale=0.08):
        return jax.random.normal(k, shape, jnp.float32) * scale

    wq = rnd(ks[0], (E, E)); wk = rnd(ks[1], (E, E)); wv = rnd(ks[2], (E, E))
    bq = rnd(ks[3], (1, E)); bk = rnd(ks[4], (1, E)); bv = rnd(ks[5], (1, E))
    wo = rnd(ks[6], (E, E)); bo = rnd(ks[7], (1, E))
    g1 = jnp.ones((1, E), jnp.float32); be1 = jnp.zeros((1, E), jnp.float32)
    w1 = rnd(ks[8], (E, F)); b1 = rnd(ks[9], (1, F))
    w2 = rnd(ks[10], (F, E), scale=0.02); b2 = rnd(ks[11], (1, E))
    g2 = jnp.ones((1, E), jnp.float32); be2 = jnp.zeros((1, E), jnp.float32)
    wlw = rnd(ks[12], (1, E)); blw = rnd(ks[13], (1, 1))
    return (wq, wk, wv, bq, bk, bv, wo, bo, g1, be1,
            w1, b1, w2, b2, g2, be2, wlw, blw)


if __name__ == "__main__":
    E = 8          # num_experts == d_model
    S = 16         # transformer "sequence" length (dim 1 of the input)
    B = 4          # transformer batch (dim 2 of the input)
    F = 2048       # nn.TransformerEncoderLayer default dim_feedforward

    key = jax.random.PRNGKey(0)
    k_in, k_par = jax.random.split(key)
    teachers_outputs = jax.random.normal(k_in, (E, S, B), jnp.float32)
    params = init_params(k_par, E, F)
    prepped = prepare_params(params)           # one-time fusion / folding

    fwd = jax.jit(transformer_combination_forward)
    out = jax.block_until_ready(fwd(teachers_outputs, prepped))

    assert out.shape == (S, B), out.shape
    assert bool(jnp.all(jnp.isfinite(out)))

    # Tight check vs. a reference using the kernel's bf16 FFN-matmul precision
    # (validates fused-QKV / block-diagonal-mask / folded-LN2 / transposed-w2 path).
    ref_matched = reference_forward(teachers_outputs, params, ffn_dtype=jnp.bfloat16)
    err_m = float(jnp.max(jnp.abs(out - ref_matched)))
    assert bool(jnp.allclose(out, ref_matched, atol=2e-3, rtol=2e-3)), err_m

    # Looser check vs. the full-f32 torch semantics (bounds the bf16 FFN drift).
    ref_f32 = reference_forward(teachers_outputs, params, ffn_dtype=jnp.float32)
    err_f = float(jnp.max(jnp.abs(out - ref_f32)))
    assert bool(jnp.allclose(out, ref_f32, atol=2e-2, rtol=2e-2)), err_f

    print("KERNEL_OK")
</pallas_src>

<mosaic_0001>
module attributes {stable_mosaic.version = 11 : i64} {
  func.func @_transformer_comb_kernel(%arg0: memref<64x8xf32, #tpu.memory_space<vmem>>, %arg1: memref<8x24xf32, #tpu.memory_space<vmem>>, %arg2: memref<1x24xf32, #tpu.memory_space<vmem>>, %arg3: memref<8x8xf32, #tpu.memory_space<vmem>>, %arg4: memref<1x8xf32, #tpu.memory_space<vmem>>, %arg5: memref<1x8xf32, #tpu.memory_space<vmem>>, %arg6: memref<1x8xf32, #tpu.memory_space<vmem>>, %arg7: memref<8x2048xbf16, #tpu.memory_space<vmem>>, %arg8: memref<1x2048xf32, #tpu.memory_space<vmem>>, %arg9: memref<8x2048xbf16, #tpu.memory_space<vmem>>, %arg10: memref<1x8xf32, #tpu.memory_space<vmem>>, %arg11: memref<1x8xf32, #tpu.memory_space<vmem>>, %arg12: memref<1x1xf32, #tpu.memory_space<smem>>, %arg13: memref<64x1xf32, #tpu.memory_space<vmem>>) attributes {dimension_semantics = [], scalar_prefetch = 0 : i64, scratch_operands = 0 : i64, tpu.core_type = #tpu.core_type<tc>} {
    %c0 = arith.constant 0 : index
    %c0_0 = arith.constant 0 : index
    %0 = vector.load %arg0[%c0, %c0_0] : memref<64x8xf32, #tpu.memory_space<vmem>>, vector<64x8xf32>
    %c0_1 = arith.constant 0 : index
    %c0_2 = arith.constant 0 : index
    %1 = vector.load %arg1[%c0_1, %c0_2] : memref<8x24xf32, #tpu.memory_space<vmem>>, vector<8x24xf32>
    %cst = arith.constant dense<0.000000e+00> : vector<64x24xf32>
    %2 = tpu.matmul %0, %1, %cst {dimension_numbers = #tpu.dot_dimension_numbers<[1], [0], [0], [1], [0, 0, 1, 1], [], []>} : vector<64x8xf32>, vector<8x24xf32>, vector<64x24xf32> -> vector<64x24xf32>
    %c0_3 = arith.constant 0 : index
    %c0_4 = arith.constant 0 : index
    %3 = vector.load %arg2[%c0_3, %c0_4] : memref<1x24xf32, #tpu.memory_space<vmem>>, vector<1x24xf32>
    %4 = vector.broadcast %3 : vector<1x24xf32> to vector<64x24xf32>
    %5 = arith.addf %2, %4 : vector<64x24xf32>
    %6 = vector.extract_strided_slice %5 {offsets = [0, 0], sizes = [64, 8], strides = [1, 1]} : vector<64x24xf32> to vector<64x8xf32>
    %7 = vector.extract_strided_slice %5 {offsets = [0, 8], sizes = [64, 8], strides = [1, 1]} : vector<64x24xf32> to vector<64x8xf32>
    %8 = vector.extract_strided_slice %5 {offsets = [0, 16], sizes = [64, 8], strides = [1, 1]} : vector<64x24xf32> to vector<64x8xf32>
    %cst_5 = arith.constant dense<0.000000e+00> : vector<64x64xf32>
    %9 = tpu.matmul %6, %7, %cst_5 {dimension_numbers = #tpu.dot_dimension_numbers<[1], [1], [0], [0], [0, 0, 1, 0], [], []>} : vector<64x8xf32>, vector<64x8xf32>, vector<64x64xf32> -> vector<64x64xf32>
    %10 = tpu.iota {dimensions = array<i32: 0>} : vector<64x64xi32>
    %11 = tpu.iota {dimensions = array<i32: 1>} : vector<64x64xi32>
    %c4_i32 = arith.constant 4 : i32
    %c0_i32 = arith.constant 0 : i32
    %12 = arith.cmpi eq, %c4_i32, %c0_i32 : i32
    %c1_i32 = arith.constant 1 : i32
    %13 = arith.select %12, %c1_i32, %c4_i32 : i32
    %14 = vector.broadcast %13 : i32 to vector<64x64xi32>
    %15 = arith.remsi %10, %14 : vector<64x64xi32>
    %c0_i32_6 = arith.constant 0 : i32
    %16 = vector.broadcast %c0_i32_6 : i32 to vector<64x64xi32>
    %17 = arith.cmpi ne, %15, %16 : vector<64x64xi32>
    %c0_i32_7 = arith.constant 0 : i32
    %18 = vector.broadcast %c0_i32_7 : i32 to vector<64x64xi32>
    %19 = arith.cmpi slt, %15, %18 : vector<64x64xi32>
    %c0_i32_8 = arith.constant 0 : i32
    %20 = arith.cmpi slt, %13, %c0_i32_8 : i32
    %21 = vector.broadcast %20 : i1 to vector<64x64xi1>
    %22 = vector.broadcast %21 : vector<64x64xi1> to vector<64x64xi1>
    %23 = arith.xori %19, %22 : vector<64x64xi1>
    %24 = arith.andi %23, %17 : vector<64x64xi1>
    %25 = vector.broadcast %13 : i32 to vector<64x64xi32>
    %26 = arith.addi %15, %25 : vector<64x64xi32>
    %27 = arith.select %24, %26, %15 : vector<64x64xi1>, vector<64x64xi32>
    %c4_i32_9 = arith.constant 4 : i32
    %c0_i32_10 = arith.constant 0 : i32
    %28 = arith.cmpi eq, %c4_i32_9, %c0_i32_10 : i32
    %c1_i32_11 = arith.constant 1 : i32
    %29 = arith.select %28, %c1_i32_11, %c4_i32_9 : i32
    %30 = vector.broadcast %29 : i32 to vector<64x64xi32>
    %31 = arith.remsi %11, %30 : vector<64x64xi32>
    %c0_i32_12 = arith.constant 0 : i32
    %32 = vector.broadcast %c0_i32_12 : i32 to vector<64x64xi32>
    %33 = arith.cmpi ne, %31, %32 : vector<64x64xi32>
    %c0_i32_13 = arith.constant 0 : i32
    %34 = vector.broadcast %c0_i32_13 : i32 to vector<64x64xi32>
    %35 = arith.cmpi slt, %31, %34 : vector<64x64xi32>
    %c0_i32_14 = arith.constant 0 : i32
    %36 = arith.cmpi slt, %29, %c0_i32_14 : i32
    %37 = vector.broadcast %36 : i1 to vector<64x64xi1>
    %38 = vector.broadcast %37 : vector<64x64xi1> to vector<64x64xi1>
    %39 = arith.xori %35, %38 : vector<64x64xi1>
    %40 = arith.andi %39, %33 : vector<64x64xi1>
    %41 = vector.broadcast %29 : i32 to vector<64x64xi32>
    %42 = arith.addi %31, %41 : vector<64x64xi32>
    %43 = arith.select %40, %42, %31 : vector<64x64xi1>, vector<64x64xi32>
    %44 = arith.cmpi eq, %27, %43 : vector<64x64xi32>
    %cst_15 = arith.constant -1.000000e+30 : f32
    %45 = vector.broadcast %cst_15 : f32 to vector<64x64xf32>
    %46 = arith.select %44, %9, %45 : vector<64x64xi1>, vector<64x64xf32>
    %cst_16 = arith.constant dense<0xFF800000> : vector<64xf32>
    %47 = vector.multi_reduction <maximumf>, %46, %cst_16 [1] : vector<64x64xf32> to vector<64xf32>
    %48 = vector.shape_cast %47 : vector<64xf32> to vector<64x1xf32>
    %49 = vector.broadcast %48 : vector<64x1xf32> to vector<64x64xf32>
    %50 = arith.subf %46, %49 : vector<64x64xf32>
    %51 = math.exp %50 : vector<64x64xf32>
    %cst_17 = arith.constant dense<0.000000e+00> : vector<64xf32>
    %52 = vector.multi_reduction <add>, %51, %cst_17 [1] : vector<64x64xf32> to vector<64xf32>
    %53 = vector.shape_cast %52 : vector<64xf32> to vector<64x1xf32>
    %54 = tpu.reciprocal %53 {approx = true} : vector<64x1xf32> -> vector<64x1xf32>
    %55 = vector.broadcast %54 : vector<64x1xf32> to vector<64x64xf32>
    %56 = arith.mulf %51, %55 : vector<64x64xf32>
    %cst_18 = arith.constant dense<0.000000e+00> : vector<64x8xf32>
    %57 = tpu.matmul %56, %8, %cst_18 {dimension_numbers = #tpu.dot_dimension_numbers<[1], [0], [0], [1], [0, 0, 1, 1], [], []>} : vector<64x64xf32>, vector<64x8xf32>, vector<64x8xf32> -> vector<64x8xf32>
    %c0_19 = arith.constant 0 : index
    %c0_20 = arith.constant 0 : index
    %58 = vector.load %arg3[%c0_19, %c0_20] : memref<8x8xf32, #tpu.memory_space<vmem>>, vector<8x8xf32>
    %cst_21 = arith.constant dense<0.000000e+00> : vector<64x8xf32>
    %59 = tpu.matmul %57, %58, %cst_21 {dimension_numbers = #tpu.dot_dimension_numbers<[1], [0], [0], [1], [0, 0, 1, 1], [], []>} : vector<64x8xf32>, vector<8x8xf32>, vector<64x8xf32> -> vector<64x8xf32>
    %c0_22 = arith.constant 0 : index
    %c0_23 = arith.constant 0 : index
    %60 = vector.load %arg4[%c0_22, %c0_23] : memref<1x8xf32, #tpu.memory_space<vmem>>, vector<1x8xf32>
    %61 = vector.broadcast %60 : vector<1x8xf32> to vector<64x8xf32>
    %62 = arith.addf %59, %61 : vector<64x8xf32>
    %63 = arith.addf %0, %62 : vector<64x8xf32>
    %c0_24 = arith.constant 0 : index
    %c0_25 = arith.constant 0 : index
    %64 = vector.load %arg5[%c0_24, %c0_25] : memref<1x8xf32, #tpu.memory_space<vmem>>, vector<1x8xf32>
    %c0_26 = arith.constant 0 : index
    %c0_27 = arith.constant 0 : index
    %65 = vector.load %arg6[%c0_26, %c0_27] : memref<1x8xf32, #tpu.memory_space<vmem>>, vector<1x8xf32>
    %cst_28 = arith.constant dense<0.000000e+00> : vector<64xf32>
    %66 = vector.multi_reduction <add>, %63, %cst_28 [1] : vector<64x8xf32> to vector<64xf32>
    %67 = vector.shape_cast %66 : vector<64xf32> to vector<64x1xf32>
    %cst_29 = arith.constant 8.000000e+00 : f32
    %68 = vector.broadcast %cst_29 : f32 to vector<64x1xf32>
    %69 = arith.divf %67, %68 : vector<64x1xf32>
    %70 = vector.broadcast %69 : vector<64x1xf32> to vector<64x8xf32>
    %71 = arith.subf %63, %70 : vector<64x8xf32>
    %72 = arith.mulf %71, %71 : vector<64x8xf32>
    %cst_30 = arith.constant dense<0.000000e+00> : vector<64xf32>
    %73 = vector.multi_reduction <add>, %72, %cst_30 [1] : vector<64x8xf32> to vector<64xf32>
    %74 = vector.shape_cast %73 : vector<64xf32> to vector<64x1xf32>
    %cst_31 = arith.constant 8.000000e+00 : f32
    %75 = vector.broadcast %cst_31 : f32 to vector<64x1xf32>
    %76 = arith.divf %74, %75 : vector<64x1xf32>
    %77 = vector.broadcast %69 : vector<64x1xf32> to vector<64x8xf32>
    %78 = arith.subf %63, %77 : vector<64x8xf32>
    %cst_32 = arith.constant 9.99999974E-6 : f32
    %79 = vector.broadcast %cst_32 : f32 to vector<64x1xf32>
    %80 = arith.addf %76, %79 : vector<64x1xf32>
    %81 = math.rsqrt %80 : vector<64x1xf32>
    %82 = vector.broadcast %81 : vector<64x1xf32> to vector<64x8xf32>
    %83 = arith.mulf %78, %82 : vector<64x8xf32>
    %84 = vector.broadcast %64 : vector<1x8xf32> to vector<64x8xf32>
    %85 = arith.mulf %83, %84 : vector<64x8xf32>
    %86 = vector.broadcast %65 : vector<1x8xf32> to vector<64x8xf32>
    %87 = arith.addf %85, %86 : vector<64x8xf32>
    %88 = arith.truncf %87 : vector<64x8xf32> to vector<64x8xbf16>
    %c0_33 = arith.constant 0 : index
    %c0_34 = arith.constant 0 : index
    %89 = vector.load %arg7[%c0_33, %c0_34] : memref<8x2048xbf16, #tpu.memory_space<vmem>>, vector<8x2048xbf16>
    %cst_35 = arith.constant dense<0.000000e+00> : vector<64x2048xf32>
    %90 = tpu.matmul %88, %89, %cst_35 {dimension_numbers = #tpu.dot_dimension_numbers<[1], [0], [0], [1], [0, 0, 1, 1], [], []>} : vector<64x8xbf16>, vector<8x2048xbf16>, vector<64x2048xf32> -> vector<64x2048xf32>
    %c0_36 = arith.constant 0 : index
    %c0_37 = arith.constant 0 : index
    %91 = vector.load %arg8[%c0_36, %c0_37] : memref<1x2048xf32, #tpu.memory_space<vmem>>, vector<1x2048xf32>
    %92 = vector.broadcast %91 : vector<1x2048xf32> to vector<64x2048xf32>
    %93 = arith.addf %90, %92 : vector<64x2048xf32>
    %cst_38 = arith.constant 0.000000e+00 : f32
    %94 = vector.broadcast %cst_38 : f32 to vector<64x2048xf32>
    %95 = arith.maximumf %93, %94 : vector<64x2048xf32>
    %96 = arith.truncf %95 : vector<64x2048xf32> to vector<64x2048xbf16>
    %c0_39 = arith.constant 0 : index
    %c0_40 = arith.constant 0 : index
    %97 = vector.load %arg9[%c0_39, %c0_40] : memref<8x2048xbf16, #tpu.memory_space<vmem>>, vector<8x2048xbf16>
    %cst_41 = arith.constant dense<0.000000e+00> : vector<64x8xf32>
    %98 = tpu.matmul %96, %97, %cst_41 {dimension_numbers = #tpu.dot_dimension_numbers<[1], [1], [0], [0], [0, 0, 1, 0], [], []>} : vector<64x2048xbf16>, vector<8x2048xbf16>, vector<64x8xf32> -> vector<64x8xf32>
    %c0_42 = arith.constant 0 : index
    %c0_43 = arith.constant 0 : index
    %99 = vector.load %arg10[%c0_42, %c0_43] : memref<1x8xf32, #tpu.memory_space<vmem>>, vector<1x8xf32>
    %100 = vector.broadcast %99 : vector<1x8xf32> to vector<64x8xf32>
    %101 = arith.addf %98, %100 : vector<64x8xf32>
    %102 = arith.addf %87, %101 : vector<64x8xf32>
    %cst_44 = arith.constant dense<0.000000e+00> : vector<64xf32>
    %103 = vector.multi_reduction <add>, %102, %cst_44 [1] : vector<64x8xf32> to vector<64xf32>
    %104 = vector.shape_cast %103 : vector<64xf32> to vector<64x1xf32>
    %cst_45 = arith.constant 8.000000e+00 : f32
    %105 = vector.broadcast %cst_45 : f32 to vector<64x1xf32>
    %106 = arith.divf %104, %105 : vector<64x1xf32>
    %107 = vector.broadcast %106 : vector<64x1xf32> to vector<64x8xf32>
    %108 = arith.subf %102, %107 : vector<64x8xf32>
    %109 = arith.mulf %108, %108 : vector<64x8xf32>
    %cst_46 = arith.constant dense<0.000000e+00> : vector<64xf32>
    %110 = vector.multi_reduction <add>, %109, %cst_46 [1] : vector<64x8xf32> to vector<64xf32>
    %111 = vector.shape_cast %110 : vector<64xf32> to vector<64x1xf32>
    %cst_47 = arith.constant 8.000000e+00 : f32
    %112 = vector.broadcast %cst_47 : f32 to vector<64x1xf32>
    %113 = arith.divf %111, %112 : vector<64x1xf32>
    %114 = vector.broadcast %106 : vector<64x1xf32> to vector<64x8xf32>
    %115 = arith.subf %102, %114 : vector<64x8xf32>
    %cst_48 = arith.constant 9.99999974E-6 : f32
    %116 = vector.broadcast %cst_48 : f32 to vector<64x1xf32>
    %117 = arith.addf %113, %116 : vector<64x1xf32>
    %118 = math.rsqrt %117 : vector<64x1xf32>
    %119 = vector.broadcast %118 : vector<64x1xf32> to vector<64x8xf32>
    %120 = arith.mulf %115, %119 : vector<64x8xf32>
    %c0_49 = arith.constant 0 : index
    %c0_50 = arith.constant 0 : index
    %121 = vector.load %arg11[%c0_49, %c0_50] : memref<1x8xf32, #tpu.memory_space<vmem>>, vector<1x8xf32>
    %122 = vector.broadcast %121 : vector<1x8xf32> to vector<64x8xf32>
    %123 = arith.mulf %120, %122 : vector<64x8xf32>
    %cst_51 = arith.constant dense<0.000000e+00> : vector<64xf32>
    %124 = vector.multi_reduction <add>, %123, %cst_51 [1] : vector<64x8xf32> to vector<64xf32>
    %125 = vector.shape_cast %124 : vector<64xf32> to vector<64x1xf32>
    %c0_52 = arith.constant 0 : index
    %c0_53 = arith.constant 0 : index
    %126 = memref.load %arg12[%c0_52, %c0_53] : memref<1x1xf32, #tpu.memory_space<smem>>
    %127 = vector.broadcast %126 : f32 to vector<64x1xf32>
    %128 = arith.addf %125, %127 : vector<64x1xf32>
    %c0_54 = arith.constant 0 : index
    %c0_55 = arith.constant 0 : index
    %129 = vector.load %arg13[%c0_54, %c0_55] : memref<64x1xf32, #tpu.memory_space<vmem>>, vector<64x1xf32>
    tpu.vector_store %arg13[%c0_54, %c0_55], %128 {strides = array<i32>} : memref<64x1xf32, #tpu.memory_space<vmem>>, vector<64x1xf32>,
    return
  }
}

</mosaic_0001>

<llo_original>
// kernel: transformer_combination_forward.1
$region0: #{transformer_combination_forward.1}
  #allocation0 [shape = 'u32[]', space=smem, size = 0x4, offset = 0x4, fixed_abs, tag = 'smem constant byte address 0x4 - core index']
  #allocation1 [shape = 'u32[144,128]{1,0:T(1,128)}', space=vmem, size = 0x12000, scoped, tag = 'internal scratch']
  #allocation2 [shape = 'f32[1,1]{1,0:T(1,128)S(6)}', space=smem, size = 0x200, scoped, tag = 'scoped memory for transformer_combination_forward.1']
  %s0 = inlined_call_operand.vmem [shape: f32[64,8], index: 0, kind: input, shape index: {}]
  %s1 = inlined_call_operand.vmem [shape: f32[8,24], index: 1, kind: input, shape index: {}]
  %s2 = inlined_call_operand.vmem [shape: f32[1,24], index: 2, kind: input, shape index: {}]
  %s3 = inlined_call_operand.vmem [shape: f32[8,8], index: 3, kind: input, shape index: {}]
  %s4 = inlined_call_operand.vmem [shape: f32[1,8], index: 4, kind: input, shape index: {}]
  %s5 = inlined_call_operand.vmem [shape: f32[1,8], index: 5, kind: input, shape index: {}]
  %s6 = inlined_call_operand.vmem [shape: f32[1,8], index: 6, kind: input, shape index: {}]
  %s7 = inlined_call_operand.vmem [shape: bf16[8,2048], index: 7, kind: input, shape index: {}]
  %s8 = inlined_call_operand.vmem [shape: f32[1,2048], index: 8, kind: input, shape index: {}]
  %s9 = inlined_call_operand.hbm [shape: bf16[8,2048], index: 9, kind: input, shape index: {}]
  %s10 = inlined_call_operand.vmem [shape: f32[1,8], index: 10, kind: input, shape index: {}]
  %s11 = inlined_call_operand.vmem [shape: f32[1,8], index: 11, kind: input, shape index: {}]
  %s12 = inlined_call_operand.<no memory space> [shape: f32[1,1], index: 12, kind: input, shape index: {}]
  %s13 = inlined_call_operand.vmem [shape: f32[64,1], index: 13, kind: output, shape index: {}]
  %s14 = sld [smem:[#allocation0]]
  $region66: #{transformer_combination_forward.1} parent=0
    _
  %s16 = ssub.s32 1, %s14
  %s17 = scalar_select 0, %s16, %s14
  %18 = sst [smem:[#allocation2]] %s12
  $region1: #{transformer_combination_forward.1} parent=0
    #allocation3 [shape = 'u8[32768]{0}', space=vmem, size = 0x8000, scoped, tag = 'input window, operand 9, single buffered']
    #allocation4 [shape = 's32[1]{0}', space=sflag, size = 0x4, scoped, tag = 'scoped memory for transformer_combination_forward.1']
    %19 = vsyncpa [#allocation4], 0
    // Predicated region
    $region2: #{transformer_combination_forward.1} parent=1 // pred_check
      _
    $region3: #{transformer_combination_forward.1} parent=1 // pred_check_branch
      %21 = sbr.rel (0) target = $region5
    $region4: #{transformer_combination_forward.1} parent=1 // pred_region
      _
    $region5: #{transformer_combination_forward.1} parent=1 // pred_fallthru
      _
    // Predicated region
    $region6: #{transformer_combination_forward.1} parent=1 // pred_check
      _
    $region7: #{transformer_combination_forward.1} parent=1 // pred_check_branch
      %23 = sbr.rel (0) target = $region9
    $region8: #{transformer_combination_forward.1} parent=1 // pred_region
      _
    $region9: #{transformer_combination_forward.1} parent=1 // pred_fallthru
      _
    // Predicated region
    $region10: #{transformer_combination_forward.1} parent=1 // pred_check
      _
    $region11: #{transformer_combination_forward.1} parent=1 // pred_check_branch
      %25 = sbr.rel (0) target = $region13
    $region12: #{transformer_combination_forward.1} parent=1 // pred_region
      _
    $region13: #{transformer_combination_forward.1} parent=1 // pred_fallthru
      _
    // Predicated region
    $region14: #{transformer_combination_forward.1} parent=1 // pred_check
      _
    $region15: #{transformer_combination_forward.1} parent=1 // pred_check_branch
      %27 = sbr.rel (0) target = $region17
    $region16: #{transformer_combination_forward.1} parent=1 // pred_region
      _
    $region17: #{transformer_combination_forward.1} parent=1 // pred_fallthru
      _
    // Predicated region
    $region18: #{transformer_combination_forward.1} parent=1 // pred_check
      _
    $region19: #{transformer_combination_forward.1} parent=1 // pred_check_branch
      %29 = sbr.rel (0) target = $region21
    $region20: #{transformer_combination_forward.1} parent=1 // pred_region
      _
    $region21: #{transformer_combination_forward.1} parent=1 // pred_fallthru
      _
    // Predicated region
    $region22: #{transformer_combination_forward.1} parent=1 // pred_check
      _
    $region23: #{transformer_combination_forward.1} parent=1 // pred_check_branch
      %31 = sbr.rel (0) target = $region25
    $region24: #{transformer_combination_forward.1} parent=1 // pred_region
      _
    $region25: #{transformer_combination_forward.1} parent=1 // pred_fallthru
      _
    // Predicated region
    $region26: #{transformer_combination_forward.1} parent=1 // pred_check
      _
    $region27: #{transformer_combination_forward.1} parent=1 // pred_check_branch
      %33 = sbr.rel (0) target = $region29
    $region28: #{transformer_combination_forward.1} parent=1 // pred_region
      _
    $region29: #{transformer_combination_forward.1} parent=1 // pred_fallthru
      _
    // Predicated region
    $region30: #{transformer_combination_forward.1} parent=1 // pred_check
      _
    $region31: #{transformer_combination_forward.1} parent=1 // pred_check_branch
      %35 = sbr.rel (0) target = $region33
    $region32: #{transformer_combination_forward.1} parent=1 // pred_region
      _
    $region33: #{transformer_combination_forward.1} parent=1 // pred_fallthru
      _
    // Predicated region
    $region34: #{transformer_combination_forward.1} parent=1 // pred_check
      _
    $region35: #{transformer_combination_forward.1} parent=1 // pred_check_branch
      %37 = sbr.rel (0) target = $region37
    $region36: #{transformer_combination_forward.1} parent=1 // pred_region
      _
    $region37: #{transformer_combination_forward.1} parent=1 // pred_fallthru
      _
    // Predicated region
    $region38: #{transformer_combination_forward.1} parent=1 // pred_check
      _
    $region39: #{transformer_combination_forward.1} parent=1 // pred_check_branch
      %39 = sbr.rel (0) target = $region41
    $region40: #{transformer_combination_forward.1} parent=1 // pred_region
      %s41 = ssub.s32 1024, 1024
      %42 = vsyncadd [#allocation4], %s41
      %s44 = sshll.u32 [#allocation3], 4
      %s45 = int_to_ptr.vmem [resolvable:$true] %s44
      %47 = dma.hbm_to_vmem [thread:$0]  %s9, 1024, %s45, [#allocation4]
    $region41: #{transformer_combination_forward.1} parent=1 // pred_fallthru
      _
    // Predicated region
    $region42: #{transformer_combination_forward.1} parent=1 // pred_check
      _
    $region43: #{transformer_combination_forward.1} parent=1 // pred_check_branch
      %49 = sbr.rel (0) target = $region45
    $region44: #{transformer_combination_forward.1} parent=1 // pred_region
      _
    $region45: #{transformer_combination_forward.1} parent=1 // pred_fallthru
      _
    // Predicated region
    $region46: #{transformer_combination_forward.1} parent=1 // pred_check
      _
    $region47: #{transformer_combination_forward.1} parent=1 // pred_check_branch
      %51 = sbr.rel (0) target = $region49
    $region48: #{transformer_combination_forward.1} parent=1 // pred_region
      _
    $region49: #{transformer_combination_forward.1} parent=1 // pred_fallthru
      _
    // Predicated region
    $region50: #{transformer_combination_forward.1} parent=1 // pred_check
      _
    $region51: #{transformer_combination_forward.1} parent=1 // pred_check_branch
      %53 = sbr.rel (0) target = $region53
    $region52: #{transformer_combination_forward.1} parent=1 // pred_region
      _
    $region53: #{transformer_combination_forward.1} parent=1 // pred_fallthru
      _
    // Predicated region
    $region54: #{transformer_combination_forward.1} parent=1 // pred_check
      _
    $region55: #{transformer_combination_forward.1} parent=1 // pred_check_branch
      %55 = sbr.rel (0) target = $region57
    $region56: #{transformer_combination_forward.1} parent=1 // pred_region
      %56 = dma.done [#allocation4], 1024
    $region57: #{transformer_combination_forward.1} parent=1 // pred_fallthru
      _
    %v58 = vld [vmem:[%s0] sm:$0xff]
    %v59 = vld [vmem:[%s0 + $0x8] sm:$0xff]
    %v60 = vld [vmem:[%s0 + $0x10] sm:$0xff]
    %v61 = vld [vmem:[%s0 + $0x18] sm:$0xff]
    %v62 = vld [vmem:[%s0 + $0x20] sm:$0xff]
    %v63 = vld [vmem:[%s0 + $0x28] sm:$0xff]
    %v64 = vld [vmem:[%s0 + $0x30] sm:$0xff]
    %v65 = vld [vmem:[%s0 + $0x38] sm:$0xff]
    %v66 = vld [vmem:[%s1] sm:$0xff]
    %v67 = vld [vmem:[%s2] sm:$0x1]
    %v69 = vlaneseq
    %v70 = vshrl.u32 %v69, 7
    %v71 = vsub.s32 0, %v70
    %v72 = vrot.slane %v67, %v71
    %vm74 = vcmask 64512
    %v76 = vsel %vm74, %v58, 0
    %v79 = vsel %vm74, %v59, 0
    %v82 = vsel %vm74, %v60, 0
    %v85 = vsel %vm74, %v61, 0
    %v88 = vsel %vm74, %v62, 0
    %v91 = vsel %vm74, %v63, 0
    %v94 = vsel %vm74, %v64, 0
    %v97 = vsel %vm74, %v65, 0
    %99 = vmatprep.subr.mxu0 0.0
    %100 = vmatpush1.msra.mxu0 0.0
    %101 = vmatprep.subr.mxu0 0.0
    %102 = vmatpush1.msra.mxu0 0.0
    %103 = vmatprep.subr.mxu0 0.0
    %104 = vmatpush1.msra.mxu0 0.0
    %105 = vmatprep.subr.mxu0 0.0
    %106 = vmatpush1.msra.mxu0 0.0
    %107 = vmatprep.subr.mxu0 0.0
    %108 = vmatpush1.msra.mxu0 0.0
    %109 = vmatprep.subr.mxu0 0.0
    %110 = vmatpush1.msra.mxu0 0.0
    %111 = vmatprep.subr.mxu0 0.0
    %112 = vmatpush1.msra.mxu0 0.0
    %113 = vmatprep.subr.mxu0 0.0
    %114 = vmatpush1.msra.mxu0 0.0
    %115 = vmatprep.subr.mxu0 0.0
    %116 = vmatpush1.msra.mxu0 0.0
    %117 = vmatprep.subr.mxu0 0.0
    %118 = vmatpush1.msra.mxu0 0.0
    %119 = vmatprep.subr.mxu0 0.0
    %120 = vmatpush1.msra.mxu0 0.0
    %121 = vmatprep.subr.mxu0 0.0
    %122 = vmatpush1.msra.mxu0 0.0
    %123 = vmatprep.subr.mxu0 0.0
    %124 = vmatpush1.msra.mxu0 0.0
    %125 = vmatprep.subr.mxu0 0.0
    %126 = vmatpush1.msra.mxu0 0.0
    %127 = vmatprep.subr.mxu0 0.0
    %128 = vmatpush1.msra.mxu0 0.0
    %129 = vmatprep.subr.mxu0 0.0
    %130 = vmatpush1.msra.mxu0 %v66
    %131 = vmatprep.subr.mxu0 0.0
    %132 = vmatpush2.msra.mxu0 0.0
    %133 = vmatprep.subr.mxu0 0.0
    %134 = vmatpush2.msra.mxu0 0.0
    %135 = vmatprep.subr.mxu0 0.0
    %136 = vmatpush2.msra.mxu0 0.0
    %137 = vmatprep.subr.mxu0 0.0
    %138 = vmatpush2.msra.mxu0 0.0
    %139 = vmatprep.subr.mxu0 0.0
    %140 = vmatpush2.msra.mxu0 0.0
    %141 = vmatprep.subr.mxu0 0.0
    %142 = vmatpush2.msra.mxu0 0.0
    %143 = vmatprep.subr.mxu0 0.0
    %144 = vmatpush2.msra.mxu0 0.0
    %145 = vmatprep.subr.mxu0 0.0
    %146 = vmatpush2.msra.mxu0 0.0
    %147 = vmatprep.subr.mxu0 0.0
    %148 = vmatpush2.msra.mxu0 0.0
    %149 = vmatprep.subr.mxu0 0.0
    %150 = vmatpush2.msra.mxu0 0.0
    %151 = vmatprep.subr.mxu0 0.0
    %152 = vmatpush2.msra.mxu0 0.0
    %153 = vmatprep.subr.mxu0 0.0
    %154 = vmatpush2.msra.mxu0 0.0
    %155 = vmatprep.subr.mxu0 0.0
    %156 = vmatpush2.msra.mxu0 0.0
    %157 = vmatprep.subr.mxu0 0.0
    %158 = vmatpush2.msra.mxu0 0.0
    %159 = vmatprep.subr.mxu0 0.0
    %160 = vmatpush2.msra.mxu0 0.0
    %161 = vmatprep.subr.mxu0 0.0
    %162 = vmatpush2.msra.mxu0 0.0
    %163 = vmatprep.mubr.f32.mxu0 0.0
    %164 = vmatmul.mubr.f32.gmra.mxu0 %v76
    %v165 = vpop.f32.mrf.mxu0
    %v166 = vadd.f32 %v72, %v165
    %v167 = vpop.f32.mrf.mxu0
    %168 = vmatprep.mubr.f32.mxu0 0.0
    %169 = vmatmul.mubr.f32.gmra.mxu0 %v79
    %v170 = vpop.f32.mrf.mxu0
    %v171 = vadd.f32 %v72, %v170
    %v172 = vpop.f32.mrf.mxu0
    %173 = vmatprep.mubr.f32.mxu0 0.0
    %174 = vmatmul.mubr.f32.gmra.mxu0 %v82
    %v175 = vpop.f32.mrf.mxu0
    %v176 = vadd.f32 %v72, %v175
    %v177 = vpop.f32.mrf.mxu0
    %178 = vmatprep.mubr.f32.mxu0 0.0
    %179 = vmatmul.mubr.f32.gmra.mxu0 %v85
    %v180 = vpop.f32.mrf.mxu0
    %v181 = vadd.f32 %v72, %v180
    %v182 = vpop.f32.mrf.mxu0
    %183 = vmatprep.mubr.f32.mxu0 0.0
    %184 = vmatmul.mubr.f32.gmra.mxu0 %v88
    %v185 = vpop.f32.mrf.mxu0
    %v186 = vadd.f32 %v72, %v185
    %v187 = vpop.f32.mrf.mxu0
    %188 = vmatprep.mubr.f32.mxu0 0.0
    %189 = vmatmul.mubr.f32.gmra.mxu0 %v91
    %v190 = vpop.f32.mrf.mxu0
    %v191 = vadd.f32 %v72, %v190
    %v192 = vpop.f32.mrf.mxu0
    %193 = vmatprep.mubr.f32.mxu0 0.0
    %194 = vmatmul.mubr.f32.gmra.mxu0 %v94
    %v195 = vpop.f32.mrf.mxu0
    %v196 = vadd.f32 %v72, %v195
    %v197 = vpop.f32.mrf.mxu0
    %198 = vmatprep.mubr.f32.mxu0 0.0
    %199 = vmatmul.mubr.f32.gmra.mxu0 %v97
    %v200 = vpop.f32.mrf.mxu0
    %v201 = vadd.f32 %v72, %v200
    %v202 = vpop.f32.mrf.mxu0
    %203 = vdwg.mxu0
    %212 = vrot.lane.b32.xlu0 %v166, 120
    %v213 = vpop.permute.xlu0 %212
    %214 = vrot.lane.b32.xlu0 %v171, 120
    %v215 = vpop.permute.xlu0 %214
    %216 = vrot.lane.b32.xlu0 %v176, 120
    %v217 = vpop.permute.xlu0 %216
    %218 = vrot.lane.b32.xlu0 %v181, 120
    %v219 = vpop.permute.xlu0 %218
    %220 = vrot.lane.b32.xlu0 %v186, 120
    %v221 = vpop.permute.xlu0 %220
    %222 = vrot.lane.b32.xlu0 %v191, 120
    %v223 = vpop.permute.xlu0 %222
    %224 = vrot.lane.b32.xlu0 %v196, 120
    %v225 = vpop.permute.xlu0 %224
    %226 = vrot.lane.b32.xlu0 %v201, 120
    %v227 = vpop.permute.xlu0 %226
    %v228 = vsel %vm74, %v166, 0
    %v230 = vsel %vm74, %v171, 0
    %v232 = vsel %vm74, %v176, 0
    %v234 = vsel %vm74, %v181, 0
    %v236 = vsel %vm74, %v186, 0
    %v238 = vsel %vm74, %v191, 0
    %v240 = vsel %vm74, %v196, 0
    %v242 = vsel %vm74, %v201, 0
    %v244 = vsel %vm74, %v213, 0
    %v246 = vsel %vm74, %v215, 0
    %v248 = vsel %vm74, %v217, 0
    %v250 = vsel %vm74, %v219, 0
    %v252 = vsel %vm74, %v221, 0
    %v254 = vsel %vm74, %v223, 0
    %v256 = vsel %vm74, %v225, 0
    %v258 = vsel %vm74, %v227, 0
    %260 = vmatprep.subr.mxu0 0.0
    %261 = vmatpush1.xpose.msra.mxu0 0.0
    %262 = vmatprep.subr.mxu0 0.0
    %263 = vmatpush1.xpose.msra.mxu0 0.0
    %264 = vmatprep.subr.mxu0 0.0
    %265 = vmatpush1.xpose.msra.mxu0 0.0
    %266 = vmatprep.subr.mxu0 0.0
    %267 = vmatpush1.xpose.msra.mxu0 0.0
    %268 = vmatprep.subr.mxu0 0.0
    %269 = vmatpush1.xpose.msra.mxu0 0.0
    %270 = vmatprep.subr.mxu0 0.0
    %271 = vmatpush1.xpose.msra.mxu0 0.0
    %272 = vmatprep.subr.mxu0 0.0
    %273 = vmatpush1.xpose.msra.mxu0 0.0
    %274 = vmatprep.subr.mxu0 0.0
    %275 = vmatpush1.xpose.msra.mxu0 0.0
    %276 = vmatprep.subr.mxu0 0.0
    %277 = vmatpush1.xpose.msra.mxu0 %v258
    %278 = vmatprep.subr.mxu0 0.0
    %279 = vmatpush1.xpose.msra.mxu0 %v256
    %280 = vmatprep.subr.mxu0 0.0
    %281 = vmatpush1.xpose.msra.mxu0 %v254
    %282 = vmatprep.subr.mxu0 0.0
    %283 = vmatpush1.xpose.msra.mxu0 %v252
    %284 = vmatprep.subr.mxu0 0.0
    %285 = vmatpush1.xpose.msra.mxu0 %v250
    %286 = vmatprep.subr.mxu0 0.0
    %287 = vmatpush1.xpose.msra.mxu0 %v248
    %288 = vmatprep.subr.mxu0 0.0
    %289 = vmatpush1.xpose.msra.mxu0 %v246
    %290 = vmatprep.subr.mxu0 0.0
    %291 = vmatpush1.xpose.msra.mxu0 %v244
    %292 = vmatprep.subr.mxu0 0.0
    %293 = vmatpush2.xpose.msra.mxu0 0.0
    %294 = vmatprep.subr.mxu0 0.0
    %295 = vmatpush2.xpose.msra.mxu0 0.0
    %296 = vmatprep.subr.mxu0 0.0
    %297 = vmatpush2.xpose.msra.mxu0 0.0
    %298 = vmatprep.subr.mxu0 0.0
    %299 = vmatpush2.xpose.msra.mxu0 0.0
    %300 = vmatprep.subr.mxu0 0.0
    %301 = vmatpush2.xpose.msra.mxu0 0.0
    %302 = vmatprep.subr.mxu0 0.0
    %303 = vmatpush2.xpose.msra.mxu0 0.0
    %304 = vmatprep.subr.mxu0 0.0
    %305 = vmatpush2.xpose.msra.mxu0 0.0
    %306 = vmatprep.subr.mxu0 0.0
    %307 = vmatpush2.xpose.msra.mxu0 0.0
    %308 = vmatprep.subr.mxu0 0.0
    %309 = vmatpush2.xpose.msra.mxu0 0.0
    %310 = vmatprep.subr.mxu0 0.0
    %311 = vmatpush2.xpose.msra.mxu0 0.0
    %312 = vmatprep.subr.mxu0 0.0
    %313 = vmatpush2.xpose.msra.mxu0 0.0
    %314 = vmatprep.subr.mxu0 0.0
    %315 = vmatpush2.xpose.msra.mxu0 0.0
    %316 = vmatprep.subr.mxu0 0.0
    %317 = vmatpush2.xpose.msra.mxu0 0.0
    %318 = vmatprep.subr.mxu0 0.0
    %319 = vmatpush2.xpose.msra.mxu0 0.0
    %320 = vmatprep.subr.mxu0 0.0
    %321 = vmatpush2.xpose.msra.mxu0 0.0
    %322 = vmatprep.subr.mxu0 0.0
    %323 = vmatpush2.xpose.msra.mxu0 0.0
    %324 = vmatprep.mubr.f32.mxu0 0.0
    %325 = vmatmul.mubr.f32.gmra.mxu0 %v228
    %v326 = vpop.f32.mrf.mxu0
    %v327 = vadd.f32 0.0, %v326
    %v328 = vpop.f32.mrf.mxu0
    %329 = vmatprep.mubr.f32.mxu0 0.0
    %330 = vmatmul.mubr.f32.gmra.mxu0 %v230
    %v331 = vpop.f32.mrf.mxu0
    %v332 = vadd.f32 0.0, %v331
    %v333 = vpop.f32.mrf.mxu0
    %334 = vmatprep.mubr.f32.mxu0 0.0
    %335 = vmatmul.mubr.f32.gmra.mxu0 %v232
    %v336 = vpop.f32.mrf.mxu0
    %v337 = vadd.f32 0.0, %v336
    %v338 = vpop.f32.mrf.mxu0
    %339 = vmatprep.mubr.f32.mxu0 0.0
    %340 = vmatmul.mubr.f32.gmra.mxu0 %v234
    %v341 = vpop.f32.mrf.mxu0
    %v342 = vadd.f32 0.0, %v341
    %v343 = vpop.f32.mrf.mxu0
    %344 = vmatprep.mubr.f32.mxu0 0.0
    %345 = vmatmul.mubr.f32.gmra.mxu0 %v236
    %v346 = vpop.f32.mrf.mxu0
    %v347 = vadd.f32 0.0, %v346
    %v348 = vpop.f32.mrf.mxu0
    %349 = vmatprep.mubr.f32.mxu0 0.0
    %350 = vmatmul.mubr.f32.gmra.mxu0 %v238
    %v351 = vpop.f32.mrf.mxu0
    %v352 = vadd.f32 0.0, %v351
    %v353 = vpop.f32.mrf.mxu0
    %354 = vmatprep.mubr.f32.mxu0 0.0
    %355 = vmatmul.mubr.f32.gmra.mxu0 %v240
    %v356 = vpop.f32.mrf.mxu0
    %v357 = vadd.f32 0.0, %v356
    %v358 = vpop.f32.mrf.mxu0
    %359 = vmatprep.mubr.f32.mxu0 0.0
    %360 = vmatmul.mubr.f32.gmra.mxu0 %v242
    %v361 = vpop.f32.mrf.mxu0
    %v362 = vadd.f32 0.0, %v361
    %v363 = vpop.f32.mrf.mxu0
    %364 = vdwg.mxu0
    %v365 = vlaneseq
    %v366 = vshrl.u32 %v365, 7
    %v367 = vadd.s32 %v366, 8
    %v368 = vadd.s32 %v366, 16
    %v369 = vadd.s32 %v366, 24
    %v370 = vadd.s32 %v366, 32
    %v371 = vadd.s32 %v366, 40
    %v372 = vadd.s32 %v366, 48
    %v373 = vadd.s32 %v366, 56
    %v374 = vlaneseq
    %v375 = vand.u32 %v374, 127
    %vm376 = vcmp.lt.s32.totalorder %v366, 0
    %v377 = vsub.s32 0, %v366
    %v378 = vsel %vm376, %v377, %v366
    %v379 = vshrl.u32 %v378, 2
    %v380 = vand.u32 %v378, 3
    %v381 = vsub.s32 0, %v380
    %v382 = vsel %vm376, %v381, %v380
    %vm383 = vcmp.lt.s32.totalorder %v367, 0
    %v384 = vsub.s32 0, %v367
    %v385 = vsel %vm383, %v384, %v367
    %v386 = vshrl.u32 %v385, 2
    %v387 = vand.u32 %v385, 3
    %v388 = vsub.s32 0, %v387
    %v389 = vsel %vm383, %v388, %v387
    %vm390 = vcmp.lt.s32.totalorder %v368, 0
    %v391 = vsub.s32 0, %v368
    %v392 = vsel %vm390, %v391, %v368
    %v393 = vshrl.u32 %v392, 2
    %v394 = vand.u32 %v392, 3
    %v395 = vsub.s32 0, %v394
    %v396 = vsel %vm390, %v395, %v394
    %vm397 = vcmp.lt.s32.totalorder %v369, 0
    %v398 = vsub.s32 0, %v369
    %v399 = vsel %vm397, %v398, %v369
    %v400 = vshrl.u32 %v399, 2
    %v401 = vand.u32 %v399, 3
    %v402 = vsub.s32 0, %v401
    %v403 = vsel %vm397, %v402, %v401
    %vm404 = vcmp.lt.s32.totalorder %v370, 0
    %v405 = vsub.s32 0, %v370
    %v406 = vsel %vm404, %v405, %v370
    %v407 = vshrl.u32 %v406, 2
    %v408 = vand.u32 %v406, 3
    %v409 = vsub.s32 0, %v408
    %v410 = vsel %vm404, %v409, %v408
    %vm411 = vcmp.lt.s32.totalorder %v371, 0
    %v412 = vsub.s32 0, %v371
    %v413 = vsel %vm411, %v412, %v371
    %v414 = vshrl.u32 %v413, 2
    %v415 = vand.u32 %v413, 3
    %v416 = vsub.s32 0, %v415
    %v417 = vsel %vm411, %v416, %v415
    %vm418 = vcmp.lt.s32.totalorder %v372, 0
    %v419 = vsub.s32 0, %v372
    %v420 = vsel %vm418, %v419, %v372
    %v421 = vshrl.u32 %v420, 2
    %v422 = vand.u32 %v420, 3
    %v423 = vsub.s32 0, %v422
    %v424 = vsel %vm418, %v423, %v422
    %vm425 = vcmp.lt.s32.totalorder %v373, 0
    %v426 = vsub.s32 0, %v373
    %v427 = vsel %vm425, %v426, %v373
    %v428 = vshrl.u32 %v427, 2
    %v429 = vand.u32 %v427, 3
    %v430 = vsub.s32 0, %v429
    %v431 = vsel %vm425, %v430, %v429
    %vm432 = vcmp.ne.s32.totalorder %v382, 0
    %vm433 = vcmp.ne.s32.totalorder %v389, 0
    %vm434 = vcmp.ne.s32.totalorder %v396, 0
    %vm435 = vcmp.ne.s32.totalorder %v403, 0
    %vm436 = vcmp.ne.s32.totalorder %v410, 0
    %vm437 = vcmp.ne.s32.totalorder %v417, 0
    %vm438 = vcmp.ne.s32.totalorder %v424, 0
    %vm439 = vcmp.ne.s32.totalorder %v431, 0
    %vm440 = vcmp.lt.s32.totalorder %v382, 0
    %vm441 = vcmp.lt.s32.totalorder %v389, 0
    %vm442 = vcmp.lt.s32.totalorder %v396, 0
    %vm443 = vcmp.lt.s32.totalorder %v403, 0
    %vm444 = vcmp.lt.s32.totalorder %v410, 0
    %vm445 = vcmp.lt.s32.totalorder %v417, 0
    %vm446 = vcmp.lt.s32.totalorder %v424, 0
    %vm447 = vcmp.lt.s32.totalorder %v431, 0
    %vm448 = vmand %vm440, %vm432
    %vm449 = vmand %vm441, %vm433
    %vm450 = vmand %vm442, %vm434
    %vm451 = vmand %vm443, %vm435
    %vm452 = vmand %vm444, %vm436
    %vm453 = vmand %vm445, %vm437
    %vm454 = vmand %vm446, %vm438
    %vm455 = vmand %vm447, %vm439
    %v456 = vadd.s32 %v382, 4
    %v457 = vadd.s32 %v389, 4
    %v458 = vadd.s32 %v396, 4
    %v459 = vadd.s32 %v403, 4
    %v460 = vadd.s32 %v410, 4
    %v461 = vadd.s32 %v417, 4
    %v462 = vadd.s32 %v424, 4
    %v463 = vadd.s32 %v431, 4
    %v464 = vsel %vm448, %v456, %v382
    %v465 = vsel %vm449, %v457, %v389
    %v466 = vsel %vm450, %v458, %v396
    %v467 = vsel %vm451, %v459, %v403
    %v468 = vsel %vm452, %v460, %v410
    %v469 = vsel %vm453, %v461, %v417
    %v470 = vsel %vm454, %v462, %v424
    %v471 = vsel %vm455, %v463, %v431
    %vm472 = vcmp.lt.s32.totalorder %v375, 0
    %v473 = vsub.s32 0, %v375
    %v474 = vsel %vm472, %v473, %v375
    %v475 = vshrl.u32 %v474, 2
    %v476 = vand.u32 %v474, 3
    %v477 = vsub.s32 0, %v476
    %v478 = vsel %vm472, %v477, %v476
    %vm479 = vcmp.ne.s32.totalorder %v478, 0
    %vm480 = vcmp.lt.s32.totalorder %v478, 0
    %vm481 = vmand %vm480, %vm479
    %v482 = vadd.s32 %v478, 4
    %v483 = vsel %vm481, %v482, %v478
    %vm484 = vcmp.eq.s32.totalorder %v464, %v483
    %vm485 = vcmp.eq.s32.totalorder %v465, %v483
    %vm486 = vcmp.eq.s32.totalorder %v466, %v483
    %vm487 = vcmp.eq.s32.totalorder %v467, %v483
    %vm488 = vcmp.eq.s32.totalorder %v468, %v483
    %vm489 = vcmp.eq.s32.totalorder %v469, %v483
    %vm490 = vcmp.eq.s32.totalorder %v470, %v483
    %vm491 = vcmp.eq.s32.totalorder %v471, %v483
    %v492 = vsel %vm484, %v327, -1e+30
    %v493 = vsel %vm485, %v332, -1e+30
    %v494 = vsel %vm486, %v337, -1e+30
    %v495 = vsel %vm487, %v342, -1e+30
    %v496 = vsel %vm488, %v347, -1e+30
    %v497 = vsel %vm489, %v352, -1e+30
    %v498 = vsel %vm490, %v357, -1e+30
    %v499 = vsel %vm491, %v362, -1e+30
    %vm500 = vcmask 523264
    %v501 = vsel %vm500, %v492, -inf
    %502 = vmax.xlane.f32.xlu0 %v501
    %v503 = vpop.xlane.xlu0 %502
    %v504 = vsel %vm500, %v493, -inf
    %505 = vmax.xlane.f32.xlu0 %v504
    %v506 = vpop.xlane.xlu0 %505
    %v507 = vsel %vm500, %v494, -inf
    %508 = vmax.xlane.f32.xlu0 %v507
    %v509 = vpop.xlane.xlu0 %508
    %v510 = vsel %vm500, %v495, -inf
    %511 = vmax.xlane.f32.xlu0 %v510
    %v512 = vpop.xlane.xlu0 %511
    %v513 = vsel %vm500, %v496, -inf
    %514 = vmax.xlane.f32.xlu0 %v513
    %v515 = vpop.xlane.xlu0 %514
    %v516 = vsel %vm500, %v497, -inf
    %517 = vmax.xlane.f32.xlu0 %v516
    %v518 = vpop.xlane.xlu0 %517
    %v519 = vsel %vm500, %v498, -inf
    %520 = vmax.xlane.f32.xlu0 %v519
    %v521 = vpop.xlane.xlu0 %520
    %v522 = vsel %vm500, %v499, -inf
    %523 = vmax.xlane.f32.xlu0 %v522
    %v524 = vpop.xlane.xlu0 %523
    %v525 = vsub.f32 %v492, %v503
    %v526 = vsub.f32 %v493, %v506
    %v527 = vsub.f32 %v494, %v509
    %v528 = vsub.f32 %v495, %v512
    %v529 = vsub.f32 %v496, %v515
    %v530 = vsub.f32 %v497, %v518
    %v531 = vsub.f32 %v498, %v521
    %v532 = vsub.f32 %v499, %v524
    %v533 = vmul.f32 %v525, 1.442695
    %v534 = vpow.pop %v533
    %v535 = vmul.f32 %v526, 1.442695
    %v536 = vpow.pop %v535
    %v537 = vmul.f32 %v527, 1.442695
    %v538 = vpow.pop %v537
    %v539 = vmul.f32 %v528, 1.442695
    %v540 = vpow.pop %v539
    %v541 = vmul.f32 %v529, 1.442695
    %v542 = vpow.pop %v541
    %v543 = vmul.f32 %v530, 1.442695
    %v544 = vpow.pop %v543
    %v545 = vmul.f32 %v531, 1.442695
    %v546 = vpow.pop %v545
    %v547 = vmul.f32 %v532, 1.442695
    %v548 = vpow.pop %v547
    %v549 = vsel %vm500, %v534, 0.0
    %550 = vadd.xlane.f32.xlu0 %v549
    %v551 = vpop.xlane.xlu0 %550
    %v552 = vsel %vm500, %v536, 0.0
    %553 = vadd.xlane.f32.xlu0 %v552
    %v554 = vpop.xlane.xlu0 %553
    %v555 = vsel %vm500, %v538, 0.0
    %556 = vadd.xlane.f32.xlu0 %v555
    %v557 = vpop.xlane.xlu0 %556
    %v558 = vsel %vm500, %v540, 0.0
    %559 = vadd.xlane.f32.xlu0 %v558
    %v560 = vpop.xlane.xlu0 %559
    %v561 = vsel %vm500, %v542, 0.0
    %562 = vadd.xlane.f32.xlu0 %v561
    %v563 = vpop.xlane.xlu0 %562
    %v564 = vsel %vm500, %v544, 0.0
    %565 = vadd.xlane.f32.xlu0 %v564
    %v566 = vpop.xlane.xlu0 %565
    %v567 = vsel %vm500, %v546, 0.0
    %568 = vadd.xlane.f32.xlu0 %v567
    %v569 = vpop.xlane.xlu0 %568
    %v570 = vsel %vm500, %v548, 0.0
    %571 = vadd.xlane.f32.xlu0 %v570
    %v572 = vpop.xlane.xlu0 %571
    %v573 = vrcp.pop %v551
    %v574 = vrcp.pop %v554
    %v575 = vrcp.pop %v557
    %v576 = vrcp.pop %v560
    %v577 = vrcp.pop %v563
    %v578 = vrcp.pop %v566
    %v579 = vrcp.pop %v569
    %v580 = vrcp.pop %v572
    %v581 = vmul.f32 %v534, %v573
    %v582 = vmul.f32 %v536, %v574
    %v583 = vmul.f32 %v538, %v575
    %v584 = vmul.f32 %v540, %v576
    %v585 = vmul.f32 %v542, %v577
    %v586 = vmul.f32 %v544, %v578
    %v587 = vmul.f32 %v546, %v579
    %v588 = vmul.f32 %v548, %v580
    %589 = vrot.lane.b32.xlu0 %v166, 112
    %v590 = vpop.permute.xlu0 %589
    %591 = vrot.lane.b32.xlu0 %v171, 112
    %v592 = vpop.permute.xlu0 %591
    %593 = vrot.lane.b32.xlu0 %v176, 112
    %v594 = vpop.permute.xlu0 %593
    %595 = vrot.lane.b32.xlu0 %v181, 112
    %v596 = vpop.permute.xlu0 %595
    %597 = vrot.lane.b32.xlu0 %v186, 112
    %v598 = vpop.permute.xlu0 %597
    %599 = vrot.lane.b32.xlu0 %v191, 112
    %v600 = vpop.permute.xlu0 %599
    %601 = vrot.lane.b32.xlu0 %v196, 112
    %v602 = vpop.permute.xlu0 %601
    %603 = vrot.lane.b32.xlu0 %v201, 112
    %v604 = vpop.permute.xlu0 %603
    %v614 = vsel %vm500, %v581, 0
    %v617 = vsel %vm500, %v582, 0
    %v620 = vsel %vm500, %v583, 0
    %v623 = vsel %vm500, %v584, 0
    %v626 = vsel %vm500, %v585, 0
    %v629 = vsel %vm500, %v586, 0
    %v632 = vsel %vm500, %v587, 0
    %v635 = vsel %vm500, %v588, 0
    %637 = vmatprep.subr.mxu0 0.0
    %638 = vmatpush1.msra.mxu0 0.0
    %639 = vmatprep.subr.mxu0 0.0
    %640 = vmatpush1.msra.mxu0 0.0
    %641 = vmatprep.subr.mxu0 0.0
    %642 = vmatpush1.msra.mxu0 0.0
    %643 = vmatprep.subr.mxu0 0.0
    %644 = vmatpush1.msra.mxu0 0.0
    %645 = vmatprep.subr.mxu0 0.0
    %646 = vmatpush1.msra.mxu0 0.0
    %647 = vmatprep.subr.mxu0 0.0
    %648 = vmatpush1.msra.mxu0 0.0
    %649 = vmatprep.subr.mxu0 0.0
    %650 = vmatpush1.msra.mxu0 0.0
    %651 = vmatprep.subr.mxu0 0.0
    %652 = vmatpush1.msra.mxu0 0.0
    %653 = vmatprep.subr.mxu0 0.0
    %654 = vmatpush1.msra.mxu0 %v604
    %655 = vmatprep.subr.mxu0 0.0
    %656 = vmatpush1.msra.mxu0 %v602
    %657 = vmatprep.subr.mxu0 0.0
    %658 = vmatpush1.msra.mxu0 %v600
    %659 = vmatprep.subr.mxu0 0.0
    %660 = vmatpush1.msra.mxu0 %v598
    %661 = vmatprep.subr.mxu0 0.0
    %662 = vmatpush1.msra.mxu0 %v596
    %663 = vmatprep.subr.mxu0 0.0
    %664 = vmatpush1.msra.mxu0 %v594
    %665 = vmatprep.subr.mxu0 0.0
    %666 = vmatpush1.msra.mxu0 %v592
    %667 = vmatprep.subr.mxu0 0.0
    %668 = vmatpush1.msra.mxu0 %v590
    %669 = vmatprep.subr.mxu0 0.0
    %670 = vmatpush2.msra.mxu0 0.0
    %671 = vmatprep.subr.mxu0 0.0
    %672 = vmatpush2.msra.mxu0 0.0
    %673 = vmatprep.subr.mxu0 0.0
    %674 = vmatpush2.msra.mxu0 0.0
    %675 = vmatprep.subr.mxu0 0.0
    %676 = vmatpush2.msra.mxu0 0.0
    %677 = vmatprep.subr.mxu0 0.0
    %678 = vmatpush2.msra.mxu0 0.0
    %679 = vmatprep.subr.mxu0 0.0
    %680 = vmatpush2.msra.mxu0 0.0
    %681 = vmatprep.subr.mxu0 0.0
    %682 = vmatpush2.msra.mxu0 0.0
    %683 = vmatprep.subr.mxu0 0.0
    %684 = vmatpush2.msra.mxu0 0.0
    %685 = vmatprep.subr.mxu0 0.0
    %686 = vmatpush2.msra.mxu0 0.0
    %687 = vmatprep.subr.mxu0 0.0
    %688 = vmatpush2.msra.mxu0 0.0
    %689 = vmatprep.subr.mxu0 0.0
    %690 = vmatpush2.msra.mxu0 0.0
    %691 = vmatprep.subr.mxu0 0.0
    %692 = vmatpush2.msra.mxu0 0.0
    %693 = vmatprep.subr.mxu0 0.0
    %694 = vmatpush2.msra.mxu0 0.0
    %695 = vmatprep.subr.mxu0 0.0
    %696 = vmatpush2.msra.mxu0 0.0
    %697 = vmatprep.subr.mxu0 0.0
    %698 = vmatpush2.msra.mxu0 0.0
    %699 = vmatprep.subr.mxu0 0.0
    %700 = vmatpush2.msra.mxu0 0.0
    %701 = vmatprep.mubr.f32.mxu0 0.0
    %702 = vmatmul.mubr.f32.gmra.mxu0 %v614
    %v703 = vpop.f32.mrf.mxu0
    %v704 = vadd.f32 0.0, %v703
    %v705 = vpop.f32.mrf.mxu0
    %706 = vmatprep.mubr.f32.mxu0 0.0
    %707 = vmatmul.mubr.f32.gmra.mxu0 %v617
    %v708 = vpop.f32.mrf.mxu0
    %v709 = vadd.f32 0.0, %v708
    %v710 = vpop.f32.mrf.mxu0
    %711 = vmatprep.mubr.f32.mxu0 0.0
    %712 = vmatmul.mubr.f32.gmra.mxu0 %v620
    %v713 = vpop.f32.mrf.mxu0
    %v714 = vadd.f32 0.0, %v713
    %v715 = vpop.f32.mrf.mxu0
    %716 = vmatprep.mubr.f32.mxu0 0.0
    %717 = vmatmul.mubr.f32.gmra.mxu0 %v623
    %v718 = vpop.f32.mrf.mxu0
    %v719 = vadd.f32 0.0, %v718
    %v720 = vpop.f32.mrf.mxu0
    %721 = vmatprep.mubr.f32.mxu0 0.0
    %722 = vmatmul.mubr.f32.gmra.mxu0 %v626
    %v723 = vpop.f32.mrf.mxu0
    %v724 = vadd.f32 0.0, %v723
    %v725 = vpop.f32.mrf.mxu0
    %726 = vmatprep.mubr.f32.mxu0 0.0
    %727 = vmatmul.mubr.f32.gmra.mxu0 %v629
    %v728 = vpop.f32.mrf.mxu0
    %v729 = vadd.f32 0.0, %v728
    %v730 = vpop.f32.mrf.mxu0
    %731 = vmatprep.mubr.f32.mxu0 0.0
    %732 = vmatmul.mubr.f32.gmra.mxu0 %v632
    %v733 = vpop.f32.mrf.mxu0
    %v734 = vadd.f32 0.0, %v733
    %v735 = vpop.f32.mrf.mxu0
    %736 = vmatprep.mubr.f32.mxu0 0.0
    %737 = vmatmul.mubr.f32.gmra.mxu0 %v635
    %v738 = vpop.f32.mrf.mxu0
    %v739 = vadd.f32 0.0, %v738
    %v740 = vpop.f32.mrf.mxu0
    %741 = vdwg.mxu0
    %v742 = vld [vmem:[%s3] sm:$0xff]
    %v743 = vld [vmem:[%s4] sm:$0x1]
    %v745 = vlaneseq
    %v746 = vshrl.u32 %v745, 7
    %v747 = vsub.s32 0, %v746
    %v748 = vrot.slane %v743, %v747
    %v751 = vsel %vm74, %v704, 0
    %v754 = vsel %vm74, %v709, 0
    %v757 = vsel %vm74, %v714, 0
    %v760 = vsel %vm74, %v719, 0
    %v763 = vsel %vm74, %v724, 0
    %v766 = vsel %vm74, %v729, 0
    %v769 = vsel %vm74, %v734, 0
    %v772 = vsel %vm74, %v739, 0
    %774 = vmatprep.subr.mxu0 0.0
    %775 = vmatpush1.msra.mxu0 0.0
    %776 = vmatprep.subr.mxu0 0.0
    %777 = vmatpush1.msra.mxu0 0.0
    %778 = vmatprep.subr.mxu0 0.0
    %779 = vmatpush1.msra.mxu0 0.0
    %780 = vmatprep.subr.mxu0 0.0
    %781 = vmatpush1.msra.mxu0 0.0
    %782 = vmatprep.subr.mxu0 0.0
    %783 = vmatpush1.msra.mxu0 0.0
    %784 = vmatprep.subr.mxu0 0.0
    %785 = vmatpush1.msra.mxu0 0.0
    %786 = vmatprep.subr.mxu0 0.0
    %787 = vmatpush1.msra.mxu0 0.0
    %788 = vmatprep.subr.mxu0 0.0
    %789 = vmatpush1.msra.mxu0 0.0
    %790 = vmatprep.subr.mxu0 0.0
    %791 = vmatpush1.msra.mxu0 0.0
    %792 = vmatprep.subr.mxu0 0.0
    %793 = vmatpush1.msra.mxu0 0.0
    %794 = vmatprep.subr.mxu0 0.0
    %795 = vmatpush1.msra.mxu0 0.0
    %796 = vmatprep.subr.mxu0 0.0
    %797 = vmatpush1.msra.mxu0 0.0
    %798 = vmatprep.subr.mxu0 0.0
    %799 = vmatpush1.msra.mxu0 0.0
    %800 = vmatprep.subr.mxu0 0.0
    %801 = vmatpush1.msra.mxu0 0.0
    %802 = vmatprep.subr.mxu0 0.0
    %803 = vmatpush1.msra.mxu0 0.0
    %804 = vmatprep.subr.mxu0 0.0
    %805 = vmatpush1.msra.mxu0 %v742
    %806 = vmatprep.subr.mxu0 0.0
    %807 = vmatpush2.msra.mxu0 0.0
    %808 = vmatprep.subr.mxu0 0.0
    %809 = vmatpush2.msra.mxu0 0.0
    %810 = vmatprep.subr.mxu0 0.0
    %811 = vmatpush2.msra.mxu0 0.0
    %812 = vmatprep.subr.mxu0 0.0
    %813 = vmatpush2.msra.mxu0 0.0
    %814 = vmatprep.subr.mxu0 0.0
    %815 = vmatpush2.msra.mxu0 0.0
    %816 = vmatprep.subr.mxu0 0.0
    %817 = vmatpush2.msra.mxu0 0.0
    %818 = vmatprep.subr.mxu0 0.0
    %819 = vmatpush2.msra.mxu0 0.0
    %820 = vmatprep.subr.mxu0 0.0
    %821 = vmatpush2.msra.mxu0 0.0
    %822 = vmatprep.subr.mxu0 0.0
    %823 = vmatpush2.msra.mxu0 0.0
    %824 = vmatprep.subr.mxu0 0.0
    %825 = vmatpush2.msra.mxu0 0.0
    %826 = vmatprep.subr.mxu0 0.0
    %827 = vmatpush2.msra.mxu0 0.0
    %828 = vmatprep.subr.mxu0 0.0
    %829 = vmatpush2.msra.mxu0 0.0
    %830 = vmatprep.subr.mxu0 0.0
    %831 = vmatpush2.msra.mxu0 0.0
    %832 = vmatprep.subr.mxu0 0.0
    %833 = vmatpush2.msra.mxu0 0.0
    %834 = vmatprep.subr.mxu0 0.0
    %835 = vmatpush2.msra.mxu0 0.0
    %836 = vmatprep.subr.mxu0 0.0
    %837 = vmatpush2.msra.mxu0 0.0
    %838 = vmatprep.mubr.f32.mxu0 0.0
    %839 = vmatmul.mubr.f32.gmra.mxu0 %v751
    %v840 = vpop.f32.mrf.mxu0
    %v841 = vadd.f32 %v748, %v840
    %v842 = vpop.f32.mrf.mxu0
    %843 = vmatprep.mubr.f32.mxu0 0.0
    %844 = vmatmul.mubr.f32.gmra.mxu0 %v754
    %v845 = vpop.f32.mrf.mxu0
    %v846 = vadd.f32 %v748, %v845
    %v847 = vpop.f32.mrf.mxu0
    %848 = vmatprep.mubr.f32.mxu0 0.0
    %849 = vmatmul.mubr.f32.gmra.mxu0 %v757
    %v850 = vpop.f32.mrf.mxu0
    %v851 = vadd.f32 %v748, %v850
    %v852 = vpop.f32.mrf.mxu0
    %853 = vmatprep.mubr.f32.mxu0 0.0
    %854 = vmatmul.mubr.f32.gmra.mxu0 %v760
    %v855 = vpop.f32.mrf.mxu0
    %v856 = vadd.f32 %v748, %v855
    %v857 = vpop.f32.mrf.mxu0
    %858 = vmatprep.mubr.f32.mxu0 0.0
    %859 = vmatmul.mubr.f32.gmra.mxu0 %v763
    %v860 = vpop.f32.mrf.mxu0
    %v861 = vadd.f32 %v748, %v860
    %v862 = vpop.f32.mrf.mxu0
    %863 = vmatprep.mubr.f32.mxu0 0.0
    %864 = vmatmul.mubr.f32.gmra.mxu0 %v766
    %v865 = vpop.f32.mrf.mxu0
    %v866 = vadd.f32 %v748, %v865
    %v867 = vpop.f32.mrf.mxu0
    %868 = vmatprep.mubr.f32.mxu0 0.0
    %869 = vmatmul.mubr.f32.gmra.mxu0 %v769
    %v870 = vpop.f32.mrf.mxu0
    %v871 = vadd.f32 %v748, %v870
    %v872 = vpop.f32.mrf.mxu0
    %873 = vmatprep.mubr.f32.mxu0 0.0
    %874 = vmatmul.mubr.f32.gmra.mxu0 %v772
    %v875 = vpop.f32.mrf.mxu0
    %v876 = vadd.f32 %v748, %v875
    %v877 = vpop.f32.mrf.mxu0
    %878 = vdwg.mxu0
    %v879 = vadd.f32 %v58, %v841
    %v880 = vadd.f32 %v59, %v846
    %v881 = vadd.f32 %v60, %v851
    %v882 = vadd.f32 %v61, %v856
    %v883 = vadd.f32 %v62, %v861
    %v884 = vadd.f32 %v63, %v866
    %v885 = vadd.f32 %v64, %v871
    %v886 = vadd.f32 %v65, %v876
    %v887 = vld [vmem:[%s5] sm:$0x1]
    %v888 = vld [vmem:[%s6] sm:$0x1]
    %v889 = vsel %vm74, %v879, 0.0
    %890 = vadd.xlane.f32.xlu0 %v889
    %v891 = vpop.xlane.xlu0 %890
    %v892 = vsel %vm74, %v880, 0.0
    %893 = vadd.xlane.f32.xlu0 %v892
    %v894 = vpop.xlane.xlu0 %893
    %v895 = vsel %vm74, %v881, 0.0
    %896 = vadd.xlane.f32.xlu0 %v895
    %v897 = vpop.xlane.xlu0 %896
    %v898 = vsel %vm74, %v882, 0.0
    %899 = vadd.xlane.f32.xlu0 %v898
    %v900 = vpop.xlane.xlu0 %899
    %v901 = vsel %vm74, %v883, 0.0
    %902 = vadd.xlane.f32.xlu0 %v901
    %v903 = vpop.xlane.xlu0 %902
    %v904 = vsel %vm74, %v884, 0.0
    %905 = vadd.xlane.f32.xlu0 %v904
    %v906 = vpop.xlane.xlu0 %905
    %v907 = vsel %vm74, %v885, 0.0
    %908 = vadd.xlane.f32.xlu0 %v907
    %v909 = vpop.xlane.xlu0 %908
    %v910 = vsel %vm74, %v886, 0.0
    %911 = vadd.xlane.f32.xlu0 %v910
    %v912 = vpop.xlane.xlu0 %911
    %v913 = vrcp.pop 8.0
    %v914 = vmul.f32 %v891, %v913
    %v915 = vmul.f32 %v894, %v913
    %v916 = vmul.f32 %v897, %v913
    %v917 = vmul.f32 %v900, %v913
    %v918 = vmul.f32 %v903, %v913
    %v919 = vmul.f32 %v906, %v913
    %v920 = vmul.f32 %v909, %v913
    %v921 = vmul.f32 %v912, %v913
    %v922 = vsub.f32 %v879, %v914
    %v923 = vsub.f32 %v880, %v915
    %v924 = vsub.f32 %v881, %v916
    %v925 = vsub.f32 %v882, %v917
    %v926 = vsub.f32 %v883, %v918
    %v927 = vsub.f32 %v884, %v919
    %v928 = vsub.f32 %v885, %v920
    %v929 = vsub.f32 %v886, %v921
    %v930 = vmul.f32 %v922, %v922
    %v931 = vmul.f32 %v923, %v923
    %v932 = vmul.f32 %v924, %v924
    %v933 = vmul.f32 %v925, %v925
    %v934 = vmul.f32 %v926, %v926
    %v935 = vmul.f32 %v927, %v927
    %v936 = vmul.f32 %v928, %v928
    %v937 = vmul.f32 %v929, %v929
    %v938 = vsel %vm74, %v930, 0.0
    %939 = vadd.xlane.f32.xlu0 %v938
    %v940 = vpop.xlane.xlu0 %939
    %v941 = vsel %vm74, %v931, 0.0
    %942 = vadd.xlane.f32.xlu0 %v941
    %v943 = vpop.xlane.xlu0 %942
    %v944 = vsel %vm74, %v932, 0.0
    %945 = vadd.xlane.f32.xlu0 %v944
    %v946 = vpop.xlane.xlu0 %945
    %v947 = vsel %vm74, %v933, 0.0
    %948 = vadd.xlane.f32.xlu0 %v947
    %v949 = vpop.xlane.xlu0 %948
    %v950 = vsel %vm74, %v934, 0.0
    %951 = vadd.xlane.f32.xlu0 %v950
    %v952 = vpop.xlane.xlu0 %951
    %v953 = vsel %vm74, %v935, 0.0
    %954 = vadd.xlane.f32.xlu0 %v953
    %v955 = vpop.xlane.xlu0 %954
    %v956 = vsel %vm74, %v936, 0.0
    %957 = vadd.xlane.f32.xlu0 %v956
    %v958 = vpop.xlane.xlu0 %957
    %v959 = vsel %vm74, %v937, 0.0
    %960 = vadd.xlane.f32.xlu0 %v959
    %v961 = vpop.xlane.xlu0 %960
    %v962 = vmul.f32 %v940, %v913
    %v963 = vmul.f32 %v943, %v913
    %v964 = vmul.f32 %v946, %v913
    %v965 = vmul.f32 %v949, %v913
    %v966 = vmul.f32 %v952, %v913
    %v967 = vmul.f32 %v955, %v913
    %v968 = vmul.f32 %v958, %v913
    %v969 = vmul.f32 %v961, %v913
    %v970 = vadd.f32 %v962, 1e-05
    %v971 = vadd.f32 %v963, 1e-05
    %v972 = vadd.f32 %v964, 1e-05
    %v973 = vadd.f32 %v965, 1e-05
    %v974 = vadd.f32 %v966, 1e-05
    %v975 = vadd.f32 %v967, 1e-05
    %v976 = vadd.f32 %v968, 1e-05
    %v977 = vadd.f32 %v969, 1e-05
    %v978 = vrsqrt.pop %v970
    %v979 = vrsqrt.pop %v971
    %v980 = vrsqrt.pop %v972
    %v981 = vrsqrt.pop %v973
    %v982 = vrsqrt.pop %v974
    %v983 = vrsqrt.pop %v975
    %v984 = vrsqrt.pop %v976
    %v985 = vrsqrt.pop %v977
    %v986 = vmul.f32 %v922, %v978
    %v987 = vmul.f32 %v923, %v979
    %v988 = vmul.f32 %v924, %v980
    %v989 = vmul.f32 %v925, %v981
    %v990 = vmul.f32 %v926, %v982
    %v991 = vmul.f32 %v927, %v983
    %v992 = vmul.f32 %v928, %v984
    %v993 = vmul.f32 %v929, %v985
    %v995 = vlaneseq
    %v996 = vshrl.u32 %v995, 7
    %v997 = vsub.s32 0, %v996
    %v998 = vrot.slane %v887, %v997
    %v1000 = vmul.f32 %v986, %v998
    %v1001 = vmul.f32 %v987, %v998
    %v1002 = vmul.f32 %v988, %v998
    %v1003 = vmul.f32 %v989, %v998
    %v1004 = vmul.f32 %v990, %v998
    %v1005 = vmul.f32 %v991, %v998
    %v1006 = vmul.f32 %v992, %v998
    %v1007 = vmul.f32 %v993, %v998
    %v1009 = vlaneseq
    %v1010 = vshrl.u32 %v1009, 7
    %v1011 = vsub.s32 0, %v1010
    %v1012 = vrot.slane %v888, %v1011
    %v1014 = vadd.f32 %v1000, %v1012
    %v1015 = vadd.f32 %v1001, %v1012
    %v1016 = vadd.f32 %v1002, %v1012
    %v1017 = vadd.f32 %v1003, %v1012
    %v1018 = vadd.f32 %v1004, %v1012
    %v1019 = vadd.f32 %v1005, %v1012
    %v1020 = vadd.f32 %v1006, %v1012
    %v1021 = vadd.f32 %v1007, %v1012
    %v1022 = vpack.c.bf16 %v1015, %v1014
    %v1023 = vpack.c.bf16 %v1017, %v1016
    %v1024 = vpack.c.bf16 %v1019, %v1018
    %v1025 = vpack.c.bf16 %v1021, %v1020
    %v1026 = vld [vmem:[%s7] sm:$0xff]
    %v1027 = vld [vmem:[%s7 + $0x8] sm:$0xff]
    %v1028 = vld [vmem:[%s7 + $0x10] sm:$0xff]
    %v1029 = vld [vmem:[%s7 + $0x18] sm:$0xff]
    %v1030 = vld [vmem:[%s7 + $0x20] sm:$0xff]
    %v1031 = vld [vmem:[%s7 + $0x28] sm:$0xff]
    %v1032 = vld [vmem:[%s7 + $0x30] sm:$0xff]
    %v1033 = vld [vmem:[%s7 + $0x38] sm:$0xff]
    %v1034 = vld [vmem:[%s8] sm:$0xff]
    %v1035 = vld [vmem:[%s8 + $0x8] sm:$0xff]
    %v1038 = vlaneseq
    %v1039 = vshrl.u32 %v1038, 7
    %v1040 = vsub.s32 0, %v1039
    %v1041 = vrot.slane %v1034, %v1040
    %v1042 = vlaneseq
    %v1043 = vshrl.u32 %v1042, 7
    %v1044 = vsub.s32 1, %v1043
    %v1045 = vrot.slane %v1034, %v1044
    %v1046 = vlaneseq
    %v1047 = vshrl.u32 %v1046, 7
    %v1048 = vsub.s32 2, %v1047
    %v1049 = vrot.slane %v1034, %v1048
    %v1050 = vlaneseq
    %v1051 = vshrl.u32 %v1050, 7
    %v1052 = vsub.s32 3, %v1051
    %v1053 = vrot.slane %v1034, %v1052
    %v1054 = vlaneseq
    %v1055 = vshrl.u32 %v1054, 7
    %v1056 = vsub.s32 4, %v1055
    %v1057 = vrot.slane %v1034, %v1056
    %v1058 = vlaneseq
    %v1059 = vshrl.u32 %v1058, 7
    %v1060 = vsub.s32 5, %v1059
    %v1061 = vrot.slane %v1034, %v1060
    %v1062 = vlaneseq
    %v1063 = vshrl.u32 %v1062, 7
    %v1064 = vsub.s32 6, %v1063
    %v1065 = vrot.slane %v1034, %v1064
    %v1066 = vlaneseq
    %v1067 = vshrl.u32 %v1066, 7
    %v1068 = vsub.s32 7, %v1067
    %v1069 = vrot.slane %v1034, %v1068
    %v1070 = vlaneseq
    %v1071 = vshrl.u32 %v1070, 7
    %v1072 = vsub.s32 0, %v1071
    %v1073 = vrot.slane %v1035, %v1072
    %v1074 = vlaneseq
    %v1075 = vshrl.u32 %v1074, 7
    %v1076 = vsub.s32 1, %v1075
    %v1077 = vrot.slane %v1035, %v1076
    %v1078 = vlaneseq
    %v1079 = vshrl.u32 %v1078, 7
    %v1080 = vsub.s32 2, %v1079
    %v1081 = vrot.slane %v1035, %v1080
    %v1082 = vlaneseq
    %v1083 = vshrl.u32 %v1082, 7
    %v1084 = vsub.s32 3, %v1083
    %v1085 = vrot.slane %v1035, %v1084
    %v1086 = vlaneseq
    %v1087 = vshrl.u32 %v1086, 7
    %v1088 = vsub.s32 4, %v1087
    %v1089 = vrot.slane %v1035, %v1088
    %v1090 = vlaneseq
    %v1091 = vshrl.u32 %v1090, 7
    %v1092 = vsub.s32 5, %v1091
    %v1093 = vrot.slane %v1035, %v1092
    %v1094 = vlaneseq
    %v1095 = vshrl.u32 %v1094, 7
    %v1096 = vsub.s32 6, %v1095
    %v1097 = vrot.slane %v1035, %v1096
    %v1098 = vlaneseq
    %v1099 = vshrl.u32 %v1098, 7
    %v1100 = vsub.s32 7, %v1099
    %v1101 = vrot.slane %v1035, %v1100
    %v1126 = vunpack.c.l.b16 %v1026
    %v1127 = vunpack.c.h.b16 %v1026
    %v1128 = vunpack.c.l.b16 %v1027
    %v1129 = vunpack.c.h.b16 %v1027
    %v1130 = vunpack.c.l.b16 %v1028
    %v1131 = vunpack.c.h.b16 %v1028
    %v1132 = vunpack.c.l.b16 %v1029
    %v1133 = vunpack.c.h.b16 %v1029
    %v1134 = vunpack.c.l.b16 %v1030
    %v1135 = vunpack.c.h.b16 %v1030
    %v1136 = vunpack.c.l.b16 %v1031
    %v1137 = vunpack.c.h.b16 %v1031
    %v1138 = vunpack.c.l.b16 %v1032
    %v1139 = vunpack.c.h.b16 %v1032
    %v1140 = vunpack.c.l.b16 %v1033
    %v1141 = vunpack.c.h.b16 %v1033
    %v1142 = vpack.c.b16 %v1126, %v1126
    %v1143 = vpack.c.b16 %v1127, %v1127
    %v1144 = vpack.c.b16 %v1128, %v1128
    %v1145 = vpack.c.b16 %v1129, %v1129
    %v1146 = vpack.c.b16 %v1130, %v1130
    %v1147 = vpack.c.b16 %v1131, %v1131
    %v1148 = vpack.c.b16 %v1132, %v1132
    %v1149 = vpack.c.b16 %v1133, %v1133
    %v1150 = vpack.c.b16 %v1134, %v1134
    %v1151 = vpack.c.b16 %v1135, %v1135
    %v1152 = vpack.c.b16 %v1136, %v1136
    %v1153 = vpack.c.b16 %v1137, %v1137
    %v1154 = vpack.c.b16 %v1138, %v1138
    %v1155 = vpack.c.b16 %v1139, %v1139
    %v1156 = vpack.c.b16 %v1140, %v1140
    %v1157 = vpack.c.b16 %v1141, %v1141
    %v1159 = vsel %vm74, %v1022, 0
    %v1162 = vsel %vm74, %v1023, 0
    %v1165 = vsel %vm74, %v1024, 0
    %v1168 = vsel %vm74, %v1025, 0
    %vm1170 = vcmask 1043456
    %v1172 = vsel %vm1170, %v1142, 0
    %v1175 = vsel %vm1170, %v1143, 0
    %v1178 = vsel %vm1170, %v1144, 0
    %v1181 = vsel %vm1170, %v1145, 0
    %v1184 = vsel %vm1170, %v1146, 0
    %v1187 = vsel %vm1170, %v1147, 0
    %v1190 = vsel %vm1170, %v1148, 0
    %v1193 = vsel %vm1170, %v1149, 0
    %v1196 = vsel %vm1170, %v1150, 0
    %v1199 = vsel %vm1170, %v1151, 0
    %v1202 = vsel %vm1170, %v1152, 0
    %v1205 = vsel %vm1170, %v1153, 0
    %v1208 = vsel %vm1170, %v1154, 0
    %v1211 = vsel %vm1170, %v1155, 0
    %v1214 = vsel %vm1170, %v1156, 0
    %v1217 = vsel %vm1170, %v1157, 0
    %1219 = vmatprep.subr.bf16.mxu0 0
    %1220 = vmatpush1.bf16.msra.mxu0 0
    %1221 = vmatprep.subr.bf16.mxu0 0
    %1222 = vmatpush1.bf16.msra.mxu0 0
    %1223 = vmatprep.subr.bf16.mxu0 0
    %1224 = vmatpush1.bf16.msra.mxu0 0
    %1225 = vmatprep.subr.bf16.mxu0 0
    %1226 = vmatpush1.bf16.msra.mxu0 0
    %1227 = vmatprep.subr.bf16.mxu0 0
    %1228 = vmatpush1.bf16.msra.mxu0 0
    %1229 = vmatprep.subr.bf16.mxu0 0
    %1230 = vmatpush1.bf16.msra.mxu0 0
    %1231 = vmatprep.subr.bf16.mxu0 0
    %1232 = vmatpush1.bf16.msra.mxu0 0
    %1233 = vmatprep.subr.bf16.mxu0 %v1175
    %1234 = vmatpush1.bf16.msra.mxu0 %v1172
    %1235 = vmatprep.subr.bf16.mxu0 0
    %1236 = vmatpush2.bf16.msra.mxu0 0
    %1237 = vmatprep.subr.bf16.mxu0 0
    %1238 = vmatpush2.bf16.msra.mxu0 0
    %1239 = vmatprep.subr.bf16.mxu0 0
    %1240 = vmatpush2.bf16.msra.mxu0 0
    %1241 = vmatprep.subr.bf16.mxu0 0
    %1242 = vmatpush2.bf16.msra.mxu0 0
    %1243 = vmatprep.subr.bf16.mxu0 0
    %1244 = vmatpush2.bf16.msra.mxu0 0
    %1245 = vmatprep.subr.bf16.mxu0 0
    %1246 = vmatpush2.bf16.msra.mxu0 0
    %1247 = vmatprep.subr.bf16.mxu0 0
    %1248 = vmatpush2.bf16.msra.mxu0 0
    %1249 = vmatprep.subr.bf16.mxu0 0
    %1250 = vmatpush2.bf16.msra.mxu0 0
    %1251 = vmatprep.mubr.bf16.mxu0 0
    %1252 = vmatmul.mubr.bf16.gmra.mxu0 %v1159
    %v1253 = vpop.f32.mrf.mxu0
    %v1254 = vadd.f32 %v1041, %v1253
    %v1255 = vpop.f32.mrf.mxu0
    %v1256 = vadd.f32 %v1045, %v1255
    %v1257 = vpop.f32.mrf.mxu0
    %v1258 = vadd.f32 %v1041, %v1257
    %v1259 = vpop.f32.mrf.mxu0
    %v1260 = vadd.f32 %v1045, %v1259
    %1261 = vmatprep.mubr.bf16.mxu0 0
    %1262 = vmatmul.mubr.bf16.gmra.mxu0 %v1162
    %v1263 = vpop.f32.mrf.mxu0
    %v1264 = vadd.f32 %v1041, %v1263
    %v1265 = vpop.f32.mrf.mxu0
    %v1266 = vadd.f32 %v1045, %v1265
    %v1267 = vpop.f32.mrf.mxu0
    %v1268 = vadd.f32 %v1041, %v1267
    %v1269 = vpop.f32.mrf.mxu0
    %v1270 = vadd.f32 %v1045, %v1269
    %1271 = vmatprep.mubr.bf16.mxu0 0
    %1272 = vmatmul.mubr.bf16.gmra.mxu0 %v1165
    %v1273 = vpop.f32.mrf.mxu0
    %v1274 = vadd.f32 %v1041, %v1273
    %v1275 = vpop.f32.mrf.mxu0
    %v1276 = vadd.f32 %v1045, %v1275
    %v1277 = vpop.f32.mrf.mxu0
    %v1278 = vadd.f32 %v1041, %v1277
    %v1279 = vpop.f32.mrf.mxu0
    %v1280 = vadd.f32 %v1045, %v1279
    %1281 = vmatprep.mubr.bf16.mxu0 0
    %1282 = vmatmul.mubr.bf16.gmra.mxu0 %v1168
    %v1283 = vpop.f32.mrf.mxu0
    %v1284 = vadd.f32 %v1041, %v1283
    %v1285 = vpop.f32.mrf.mxu0
    %v1286 = vadd.f32 %v1045, %v1285
    %v1287 = vpop.f32.mrf.mxu0
    %v1288 = vadd.f32 %v1041, %v1287
    %v1289 = vpop.f32.mrf.mxu0
    %v1290 = vadd.f32 %v1045, %v1289
    %1291 = vdwg.mxu0
    %1292 = vmatprep.subr.bf16.mxu0 0
    %1293 = vmatpush1.bf16.msra.mxu0 0
    %1294 = vmatprep.subr.bf16.mxu0 0
    %1295 = vmatpush1.bf16.msra.mxu0 0
    %1296 = vmatprep.subr.bf16.mxu0 0
    %1297 = vmatpush1.bf16.msra.mxu0 0
    %1298 = vmatprep.subr.bf16.mxu0 0
    %1299 = vmatpush1.bf16.msra.mxu0 0
    %1300 = vmatprep.subr.bf16.mxu0 0
    %1301 = vmatpush1.bf16.msra.mxu0 0
    %1302 = vmatprep.subr.bf16.mxu0 0
    %1303 = vmatpush1.bf16.msra.mxu0 0
    %1304 = vmatprep.subr.bf16.mxu0 0
    %1305 = vmatpush1.bf16.msra.mxu0 0
    %1306 = vmatprep.subr.bf16.mxu0 %v1181
    %1307 = vmatpush1.bf16.msra.mxu0 %v1178
    %1308 = vmatprep.subr.bf16.mxu0 0
    %1309 = vmatpush2.bf16.msra.mxu0 0
    %1310 = vmatprep.subr.bf16.mxu0 0
    %1311 = vmatpush2.bf16.msra.mxu0 0
    %1312 = vmatprep.subr.bf16.mxu0 0
    %1313 = vmatpush2.bf16.msra.mxu0 0
    %1314 = vmatprep.subr.bf16.mxu0 0
    %1315 = vmatpush2.bf16.msra.mxu0 0
    %1316 = vmatprep.subr.bf16.mxu0 0
    %1317 = vmatpush2.bf16.msra.mxu0 0
    %1318 = vmatprep.subr.bf16.mxu0 0
    %1319 = vmatpush2.bf16.msra.mxu0 0
    %1320 = vmatprep.subr.bf16.mxu0 0
    %1321 = vmatpush2.bf16.msra.mxu0 0
    %1322 = vmatprep.subr.bf16.mxu0 0
    %1323 = vmatpush2.bf16.msra.mxu0 0
    %1324 = vmatprep.mubr.bf16.mxu0 0
    %1325 = vmatmul.mubr.bf16.gmra.mxu0 %v1159
    %v1326 = vpop.f32.mrf.mxu0
    %v1327 = vadd.f32 %v1049, %v1326
    %v1328 = vpop.f32.mrf.mxu0
    %v1329 = vadd.f32 %v1053, %v1328
    %v1330 = vpop.f32.mrf.mxu0
    %v1331 = vadd.f32 %v1049, %v1330
    %v1332 = vpop.f32.mrf.mxu0
    %v1333 = vadd.f32 %v1053, %v1332
    %1334 = vmatprep.mubr.bf16.mxu0 0
    %1335 = vmatmul.mubr.bf16.gmra.mxu0 %v1162
    %v1336 = vpop.f32.mrf.mxu0
    %v1337 = vadd.f32 %v1049, %v1336
    %v1338 = vpop.f32.mrf.mxu0
    %v1339 = vadd.f32 %v1053, %v1338
    %v1340 = vpop.f32.mrf.mxu0
    %v1341 = vadd.f32 %v1049, %v1340
    %v1342 = vpop.f32.mrf.mxu0
    %v1343 = vadd.f32 %v1053, %v1342
    %1344 = vmatprep.mubr.bf16.mxu0 0
    %1345 = vmatmul.mubr.bf16.gmra.mxu0 %v1165
    %v1346 = vpop.f32.mrf.mxu0
    %v1347 = vadd.f32 %v1049, %v1346
    %v1348 = vpop.f32.mrf.mxu0
    %v1349 = vadd.f32 %v1053, %v1348
    %v1350 = vpop.f32.mrf.mxu0
    %v1351 = vadd.f32 %v1049, %v1350
    %v1352 = vpop.f32.mrf.mxu0
    %v1353 = vadd.f32 %v1053, %v1352
    %1354 = vmatprep.mubr.bf16.mxu0 0
    %1355 = vmatmul.mubr.bf16.gmra.mxu0 %v1168
    %v1356 = vpop.f32.mrf.mxu0
    %v1357 = vadd.f32 %v1049, %v1356
    %v1358 = vpop.f32.mrf.mxu0
    %v1359 = vadd.f32 %v1053, %v1358
    %v1360 = vpop.f32.mrf.mxu0
    %v1361 = vadd.f32 %v1049, %v1360
    %v1362 = vpop.f32.mrf.mxu0
    %v1363 = vadd.f32 %v1053, %v1362
    %1364 = vdwg.mxu0
    %1365 = vmatprep.subr.bf16.mxu0 0
    %1366 = vmatpush1.bf16.msra.mxu0 0
    %1367 = vmatprep.subr.bf16.mxu0 0
    %1368 = vmatpush1.bf16.msra.mxu0 0
    %1369 = vmatprep.subr.bf16.mxu0 0
    %1370 = vmatpush1.bf16.msra.mxu0 0
    %1371 = vmatprep.subr.bf16.mxu0 0
    %1372 = vmatpush1.bf16.msra.mxu0 0
    %1373 = vmatprep.subr.bf16.mxu0 0
    %1374 = vmatpush1.bf16.msra.mxu0 0
    %1375 = vmatprep.subr.bf16.mxu0 0
    %1376 = vmatpush1.bf16.msra.mxu0 0
    %1377 = vmatprep.subr.bf16.mxu0 0
    %1378 = vmatpush1.bf16.msra.mxu0 0
    %1379 = vmatprep.subr.bf16.mxu0 %v1187
    %1380 = vmatpush1.bf16.msra.mxu0 %v1184
    %1381 = vmatprep.subr.bf16.mxu0 0
    %1382 = vmatpush2.bf16.msra.mxu0 0
    %1383 = vmatprep.subr.bf16.mxu0 0
    %1384 = vmatpush2.bf16.msra.mxu0 0
    %1385 = vmatprep.subr.bf16.mxu0 0
    %1386 = vmatpush2.bf16.msra.mxu0 0
    %1387 = vmatprep.subr.bf16.mxu0 0
    %1388 = vmatpush2.bf16.msra.mxu0 0
    %1389 = vmatprep.subr.bf16.mxu0 0
    %1390 = vmatpush2.bf16.msra.mxu0 0
    %1391 = vmatprep.subr.bf16.mxu0 0
    %1392 = vmatpush2.bf16.msra.mxu0 0
    %1393 = vmatprep.subr.bf16.mxu0 0
    %1394 = vmatpush2.bf16.msra.mxu0 0
    %1395 = vmatprep.subr.bf16.mxu0 0
    %1396 = vmatpush2.bf16.msra.mxu0 0
    %1397 = vmatprep.mubr.bf16.mxu0 0
    %1398 = vmatmul.mubr.bf16.gmra.mxu0 %v1159
    %v1399 = vpop.f32.mrf.mxu0
    %v1400 = vadd.f32 %v1057, %v1399
    %v1401 = vpop.f32.mrf.mxu0
    %v1402 = vadd.f32 %v1061, %v1401
    %v1403 = vpop.f32.mrf.mxu0
    %v1404 = vadd.f32 %v1057, %v1403
    %v1405 = vpop.f32.mrf.mxu0
    %v1406 = vadd.f32 %v1061, %v1405
    %1407 = vmatprep.mubr.bf16.mxu0 0
    %1408 = vmatmul.mubr.bf16.gmra.mxu0 %v1162
    %v1409 = vpop.f32.mrf.mxu0
    %v1410 = vadd.f32 %v1057, %v1409
    %v1411 = vpop.f32.mrf.mxu0
    %v1412 = vadd.f32 %v1061, %v1411
    %v1413 = vpop.f32.mrf.mxu0
    %v1414 = vadd.f32 %v1057, %v1413
    %v1415 = vpop.f32.mrf.mxu0
    %v1416 = vadd.f32 %v1061, %v1415
    %1417 = vmatprep.mubr.bf16.mxu0 0
    %1418 = vmatmul.mubr.bf16.gmra.mxu0 %v1165
    %v1419 = vpop.f32.mrf.mxu0
    %v1420 = vadd.f32 %v1057, %v1419
    %v1421 = vpop.f32.mrf.mxu0
    %v1422 = vadd.f32 %v1061, %v1421
    %v1423 = vpop.f32.mrf.mxu0
    %v1424 = vadd.f32 %v1057, %v1423
    %v1425 = vpop.f32.mrf.mxu0
    %v1426 = vadd.f32 %v1061, %v1425
    %1427 = vmatprep.mubr.bf16.mxu0 0
    %1428 = vmatmul.mubr.bf16.gmra.mxu0 %v1168
    %v1429 = vpop.f32.mrf.mxu0
    %v1430 = vadd.f32 %v1057, %v1429
    %v1431 = vpop.f32.mrf.mxu0
    %v1432 = vadd.f32 %v1061, %v1431
    %v1433 = vpop.f32.mrf.mxu0
    %v1434 = vadd.f32 %v1057, %v1433
    %v1435 = vpop.f32.mrf.mxu0
    %v1436 = vadd.f32 %v1061, %v1435
    %1437 = vdwg.mxu0
    %1438 = vmatprep.subr.bf16.mxu0 0
    %1439 = vmatpush1.bf16.msra.mxu0 0
    %1440 = vmatprep.subr.bf16.mxu0 0
    %1441 = vmatpush1.bf16.msra.mxu0 0
    %1442 = vmatprep.subr.bf16.mxu0 0
    %1443 = vmatpush1.bf16.msra.mxu0 0
    %1444 = vmatprep.subr.bf16.mxu0 0
    %1445 = vmatpush1.bf16.msra.mxu0 0
    %1446 = vmatprep.subr.bf16.mxu0 0
    %1447 = vmatpush1.bf16.msra.mxu0 0
    %1448 = vmatprep.subr.bf16.mxu0 0
    %1449 = vmatpush1.bf16.msra.mxu0 0
    %1450 = vmatprep.subr.bf16.mxu0 0
    %1451 = vmatpush1.bf16.msra.mxu0 0
    %1452 = vmatprep.subr.bf16.mxu0 %v1193
    %1453 = vmatpush1.bf16.msra.mxu0 %v1190
    %1454 = vmatprep.subr.bf16.mxu0 0
    %1455 = vmatpush2.bf16.msra.mxu0 0
    %1456 = vmatprep.subr.bf16.mxu0 0
    %1457 = vmatpush2.bf16.msra.mxu0 0
    %1458 = vmatprep.subr.bf16.mxu0 0
    %1459 = vmatpush2.bf16.msra.mxu0 0
    %1460 = vmatprep.subr.bf16.mxu0 0
    %1461 = vmatpush2.bf16.msra.mxu0 0
    %1462 = vmatprep.subr.bf16.mxu0 0
    %1463 = vmatpush2.bf16.msra.mxu0 0
    %1464 = vmatprep.subr.bf16.mxu0 0
    %1465 = vmatpush2.bf16.msra.mxu0 0
    %1466 = vmatprep.subr.bf16.mxu0 0
    %1467 = vmatpush2.bf16.msra.mxu0 0
    %1468 = vmatprep.subr.bf16.mxu0 0
    %1469 = vmatpush2.bf16.msra.mxu0 0
    %1470 = vmatprep.mubr.bf16.mxu0 0
    %1471 = vmatmul.mubr.bf16.gmra.mxu0 %v1159
    %v1472 = vpop.f32.mrf.mxu0
    %v1473 = vadd.f32 %v1065, %v1472
    %v1474 = vpop.f32.mrf.mxu0
    %v1475 = vadd.f32 %v1069, %v1474
    %v1476 = vpop.f32.mrf.mxu0
    %v1477 = vadd.f32 %v1065, %v1476
    %v1478 = vpop.f32.mrf.mxu0
    %v1479 = vadd.f32 %v1069, %v1478
    %1480 = vmatprep.mubr.bf16.mxu0 0
    %1481 = vmatmul.mubr.bf16.gmra.mxu0 %v1162
    %v1482 = vpop.f32.mrf.mxu0
    %v1483 = vadd.f32 %v1065, %v1482
    %v1484 = vpop.f32.mrf.mxu0
    %v1485 = vadd.f32 %v1069, %v1484
    %v1486 = vpop.f32.mrf.mxu0
    %v1487 = vadd.f32 %v1065, %v1486
    %v1488 = vpop.f32.mrf.mxu0
    %v1489 = vadd.f32 %v1069, %v1488
    %1490 = vmatprep.mubr.bf16.mxu0 0
    %1491 = vmatmul.mubr.bf16.gmra.mxu0 %v1165
    %v1492 = vpop.f32.mrf.mxu0
    %v1493 = vadd.f32 %v1065, %v1492
    %v1494 = vpop.f32.mrf.mxu0
    %v1495 = vadd.f32 %v1069, %v1494
    %v1496 = vpop.f32.mrf.mxu0
    %v1497 = vadd.f32 %v1065, %v1496
    %v1498 = vpop.f32.mrf.mxu0
    %v1499 = vadd.f32 %v1069, %v1498
    %1500 = vmatprep.mubr.bf16.mxu0 0
    %1501 = vmatmul.mubr.bf16.gmra.mxu0 %v1168
    %v1502 = vpop.f32.mrf.mxu0
    %v1503 = vadd.f32 %v1065, %v1502
    %v1504 = vpop.f32.mrf.mxu0
    %v1505 = vadd.f32 %v1069, %v1504
    %v1506 = vpop.f32.mrf.mxu0
    %v1507 = vadd.f32 %v1065, %v1506
    %v1508 = vpop.f32.mrf.mxu0
    %v1509 = vadd.f32 %v1069, %v1508
    %1510 = vdwg.mxu0
    %1511 = vmatprep.subr.bf16.mxu0 0
    %1512 = vmatpush1.bf16.msra.mxu0 0
    %1513 = vmatprep.subr.bf16.mxu0 0
    %1514 = vmatpush1.bf16.msra.mxu0 0
    %1515 = vmatprep.subr.bf16.mxu0 0
    %1516 = vmatpush1.bf16.msra.mxu0 0
    %1517 = vmatprep.subr.bf16.mxu0 0
    %1518 = vmatpush1.bf16.msra.mxu0 0
    %1519 = vmatprep.subr.bf16.mxu0 0
    %1520 = vmatpush1.bf16.msra.mxu0 0
    %1521 = vmatprep.subr.bf16.mxu0 0
    %1522 = vmatpush1.bf16.msra.mxu0 0
    %1523 = vmatprep.subr.bf16.mxu0 0
    %1524 = vmatpush1.bf16.msra.mxu0 0
    %1525 = vmatprep.subr.bf16.mxu0 %v1199
    %1526 = vmatpush1.bf16.msra.mxu0 %v1196
    %1527 = vmatprep.subr.bf16.mxu0 0
    %1528 = vmatpush2.bf16.msra.mxu0 0
    %1529 = vmatprep.subr.bf16.mxu0 0
    %1530 = vmatpush2.bf16.msra.mxu0 0
    %1531 = vmatprep.subr.bf16.mxu0 0
    %1532 = vmatpush2.bf16.msra.mxu0 0
    %1533 = vmatprep.subr.bf16.mxu0 0
    %1534 = vmatpush2.bf16.msra.mxu0 0
    %1535 = vmatprep.subr.bf16.mxu0 0
    %1536 = vmatpush2.bf16.msra.mxu0 0
    %1537 = vmatprep.subr.bf16.mxu0 0
    %1538 = vmatpush2.bf16.msra.mxu0 0
    %1539 = vmatprep.subr.bf16.mxu0 0
    %1540 = vmatpush2.bf16.msra.mxu0 0
    %1541 = vmatprep.subr.bf16.mxu0 0
    %1542 = vmatpush2.bf16.msra.mxu0 0
    %1543 = vmatprep.mubr.bf16.mxu0 0
    %1544 = vmatmul.mubr.bf16.gmra.mxu0 %v1159
    %v1545 = vpop.f32.mrf.mxu0
    %v1546 = vadd.f32 %v1073, %v1545
    %v1547 = vpop.f32.mrf.mxu0
    %v1548 = vadd.f32 %v1077, %v1547
    %v1549 = vpop.f32.mrf.mxu0
    %v1550 = vadd.f32 %v1073, %v1549
    %v1551 = vpop.f32.mrf.mxu0
    %v1552 = vadd.f32 %v1077, %v1551
    %1553 = vmatprep.mubr.bf16.mxu0 0
    %1554 = vmatmul.mubr.bf16.gmra.mxu0 %v1162
    %v1555 = vpop.f32.mrf.mxu0
    %v1556 = vadd.f32 %v1073, %v1555
    %v1557 = vpop.f32.mrf.mxu0
    %v1558 = vadd.f32 %v1077, %v1557
    %v1559 = vpop.f32.mrf.mxu0
    %v1560 = vadd.f32 %v1073, %v1559
    %v1561 = vpop.f32.mrf.mxu0
    %v1562 = vadd.f32 %v1077, %v1561
    %1563 = vmatprep.mubr.bf16.mxu0 0
    %1564 = vmatmul.mubr.bf16.gmra.mxu0 %v1165
    %v1565 = vpop.f32.mrf.mxu0
    %v1566 = vadd.f32 %v1073, %v1565
    %v1567 = vpop.f32.mrf.mxu0
    %v1568 = vadd.f32 %v1077, %v1567
    %v1569 = vpop.f32.mrf.mxu0
    %v1570 = vadd.f32 %v1073, %v1569
    %v1571 = vpop.f32.mrf.mxu0
    %v1572 = vadd.f32 %v1077, %v1571
    %1573 = vmatprep.mubr.bf16.mxu0 0
    %1574 = vmatmul.mubr.bf16.gmra.mxu0 %v1168
    %v1575 = vpop.f32.mrf.mxu0
    %v1576 = vadd.f32 %v1073, %v1575
    %v1577 = vpop.f32.mrf.mxu0
    %v1578 = vadd.f32 %v1077, %v1577
    %v1579 = vpop.f32.mrf.mxu0
    %v1580 = vadd.f32 %v1073, %v1579
    %v1581 = vpop.f32.mrf.mxu0
    %v1582 = vadd.f32 %v1077, %v1581
    %1583 = vdwg.mxu0
    %1584 = vmatprep.subr.bf16.mxu0 0
    %1585 = vmatpush1.bf16.msra.mxu0 0
    %1586 = vmatprep.subr.bf16.mxu0 0
    %1587 = vmatpush1.bf16.msra.mxu0 0
    %1588 = vmatprep.subr.bf16.mxu0 0
    %1589 = vmatpush1.bf16.msra.mxu0 0
    %1590 = vmatprep.subr.bf16.mxu0 0
    %1591 = vmatpush1.bf16.msra.mxu0 0
    %1592 = vmatprep.subr.bf16.mxu0 0
    %1593 = vmatpush1.bf16.msra.mxu0 0
    %1594 = vmatprep.subr.bf16.mxu0 0
    %1595 = vmatpush1.bf16.msra.mxu0 0
    %1596 = vmatprep.subr.bf16.mxu0 0
    %1597 = vmatpush1.bf16.msra.mxu0 0
    %1598 = vmatprep.subr.bf16.mxu0 %v1205
    %1599 = vmatpush1.bf16.msra.mxu0 %v1202
    %1600 = vmatprep.subr.bf16.mxu0 0
    %1601 = vmatpush2.bf16.msra.mxu0 0
    %1602 = vmatprep.subr.bf16.mxu0 0
    %1603 = vmatpush2.bf16.msra.mxu0 0
    %1604 = vmatprep.subr.bf16.mxu0 0
    %1605 = vmatpush2.bf16.msra.mxu0 0
    %1606 = vmatprep.subr.bf16.mxu0 0
    %1607 = vmatpush2.bf16.msra.mxu0 0
    %1608 = vmatprep.subr.bf16.mxu0 0
    %1609 = vmatpush2.bf16.msra.mxu0 0
    %1610 = vmatprep.subr.bf16.mxu0 0
    %1611 = vmatpush2.bf16.msra.mxu0 0
    %1612 = vmatprep.subr.bf16.mxu0 0
    %1613 = vmatpush2.bf16.msra.mxu0 0
    %1614 = vmatprep.subr.bf16.mxu0 0
    %1615 = vmatpush2.bf16.msra.mxu0 0
    %1616 = vmatprep.mubr.bf16.mxu0 0
    %1617 = vmatmul.mubr.bf16.gmra.mxu0 %v1159
    %v1618 = vpop.f32.mrf.mxu0
    %v1619 = vadd.f32 %v1081, %v1618
    %v1620 = vpop.f32.mrf.mxu0
    %v1621 = vadd.f32 %v1085, %v1620
    %v1622 = vpop.f32.mrf.mxu0
    %v1623 = vadd.f32 %v1081, %v1622
    %v1624 = vpop.f32.mrf.mxu0
    %v1625 = vadd.f32 %v1085, %v1624
    %1626 = vmatprep.mubr.bf16.mxu0 0
    %1627 = vmatmul.mubr.bf16.gmra.mxu0 %v1162
    %v1628 = vpop.f32.mrf.mxu0
    %v1629 = vadd.f32 %v1081, %v1628
    %v1630 = vpop.f32.mrf.mxu0
    %v1631 = vadd.f32 %v1085, %v1630
    %v1632 = vpop.f32.mrf.mxu0
    %v1633 = vadd.f32 %v1081, %v1632
    %v1634 = vpop.f32.mrf.mxu0
    %v1635 = vadd.f32 %v1085, %v1634
    %1636 = vmatprep.mubr.bf16.mxu0 0
    %1637 = vmatmul.mubr.bf16.gmra.mxu0 %v1165
    %v1638 = vpop.f32.mrf.mxu0
    %v1639 = vadd.f32 %v1081, %v1638
    %v1640 = vpop.f32.mrf.mxu0
    %v1641 = vadd.f32 %v1085, %v1640
    %v1642 = vpop.f32.mrf.mxu0
    %v1643 = vadd.f32 %v1081, %v1642
    %v1644 = vpop.f32.mrf.mxu0
    %v1645 = vadd.f32 %v1085, %v1644
    %1646 = vmatprep.mubr.bf16.mxu0 0
    %1647 = vmatmul.mubr.bf16.gmra.mxu0 %v1168
    %v1648 = vpop.f32.mrf.mxu0
    %v1649 = vadd.f32 %v1081, %v1648
    %v1650 = vpop.f32.mrf.mxu0
    %v1651 = vadd.f32 %v1085, %v1650
    %v1652 = vpop.f32.mrf.mxu0
    %v1653 = vadd.f32 %v1081, %v1652
    %v1654 = vpop.f32.mrf.mxu0
    %v1655 = vadd.f32 %v1085, %v1654
    %1656 = vdwg.mxu0
    %1657 = vmatprep.subr.bf16.mxu0 0
    %1658 = vmatpush1.bf16.msra.mxu0 0
    %1659 = vmatprep.subr.bf16.mxu0 0
    %1660 = vmatpush1.bf16.msra.mxu0 0
    %1661 = vmatprep.subr.bf16.mxu0 0
    %1662 = vmatpush1.bf16.msra.mxu0 0
    %1663 = vmatprep.subr.bf16.mxu0 0
    %1664 = vmatpush1.bf16.msra.mxu0 0
    %1665 = vmatprep.subr.bf16.mxu0 0
    %1666 = vmatpush1.bf16.msra.mxu0 0
    %1667 = vmatprep.subr.bf16.mxu0 0
    %1668 = vmatpush1.bf16.msra.mxu0 0
    %1669 = vmatprep.subr.bf16.mxu0 0
    %1670 = vmatpush1.bf16.msra.mxu0 0
    %1671 = vmatprep.subr.bf16.mxu0 %v1211
    %1672 = vmatpush1.bf16.msra.mxu0 %v1208
    %1673 = vmatprep.subr.bf16.mxu0 0
    %1674 = vmatpush2.bf16.msra.mxu0 0
    %1675 = vmatprep.subr.bf16.mxu0 0
    %1676 = vmatpush2.bf16.msra.mxu0 0
    %1677 = vmatprep.subr.bf16.mxu0 0
    %1678 = vmatpush2.bf16.msra.mxu0 0
    %1679 = vmatprep.subr.bf16.mxu0 0
    %1680 = vmatpush2.bf16.msra.mxu0 0
    %1681 = vmatprep.subr.bf16.mxu0 0
    %1682 = vmatpush2.bf16.msra.mxu0 0
    %1683 = vmatprep.subr.bf16.mxu0 0
    %1684 = vmatpush2.bf16.msra.mxu0 0
    %1685 = vmatprep.subr.bf16.mxu0 0
    %1686 = vmatpush2.bf16.msra.mxu0 0
    %1687 = vmatprep.subr.bf16.mxu0 0
    %1688 = vmatpush2.bf16.msra.mxu0 0
    %1689 = vmatprep.mubr.bf16.mxu0 0
    %1690 = vmatmul.mubr.bf16.gmra.mxu0 %v1159
    %v1691 = vpop.f32.mrf.mxu0
    %v1692 = vadd.f32 %v1089, %v1691
    %v1693 = vpop.f32.mrf.mxu0
    %v1694 = vadd.f32 %v1093, %v1693
    %v1695 = vpop.f32.mrf.mxu0
    %v1696 = vadd.f32 %v1089, %v1695
    %v1697 = vpop.f32.mrf.mxu0
    %v1698 = vadd.f32 %v1093, %v1697
    %1699 = vmatprep.mubr.bf16.mxu0 0
    %1700 = vmatmul.mubr.bf16.gmra.mxu0 %v1162
    %v1701 = vpop.f32.mrf.mxu0
    %v1702 = vadd.f32 %v1089, %v1701
    %v1703 = vpop.f32.mrf.mxu0
    %v1704 = vadd.f32 %v1093, %v1703
    %v1705 = vpop.f32.mrf.mxu0
    %v1706 = vadd.f32 %v1089, %v1705
    %v1707 = vpop.f32.mrf.mxu0
    %v1708 = vadd.f32 %v1093, %v1707
    %1709 = vmatprep.mubr.bf16.mxu0 0
    %1710 = vmatmul.mubr.bf16.gmra.mxu0 %v1165
    %v1711 = vpop.f32.mrf.mxu0
    %v1712 = vadd.f32 %v1089, %v1711
    %v1713 = vpop.f32.mrf.mxu0
    %v1714 = vadd.f32 %v1093, %v1713
    %v1715 = vpop.f32.mrf.mxu0
    %v1716 = vadd.f32 %v1089, %v1715
    %v1717 = vpop.f32.mrf.mxu0
    %v1718 = vadd.f32 %v1093, %v1717
    %1719 = vmatprep.mubr.bf16.mxu0 0
    %1720 = vmatmul.mubr.bf16.gmra.mxu0 %v1168
    %v1721 = vpop.f32.mrf.mxu0
    %v1722 = vadd.f32 %v1089, %v1721
    %v1723 = vpop.f32.mrf.mxu0
    %v1724 = vadd.f32 %v1093, %v1723
    %v1725 = vpop.f32.mrf.mxu0
    %v1726 = vadd.f32 %v1089, %v1725
    %v1727 = vpop.f32.mrf.mxu0
    %v1728 = vadd.f32 %v1093, %v1727
    %1729 = vdwg.mxu0
    %1730 = vmatprep.subr.bf16.mxu0 0
    %1731 = vmatpush1.bf16.msra.mxu0 0
    %1732 = vmatprep.subr.bf16.mxu0 0
    %1733 = vmatpush1.bf16.msra.mxu0 0
    %1734 = vmatprep.subr.bf16.mxu0 0
    %1735 = vmatpush1.bf16.msra.mxu0 0
    %1736 = vmatprep.subr.bf16.mxu0 0
    %1737 = vmatpush1.bf16.msra.mxu0 0
    %1738 = vmatprep.subr.bf16.mxu0 0
    %1739 = vmatpush1.bf16.msra.mxu0 0
    %1740 = vmatprep.subr.bf16.mxu0 0
    %1741 = vmatpush1.bf16.msra.mxu0 0
    %1742 = vmatprep.subr.bf16.mxu0 0
    %1743 = vmatpush1.bf16.msra.mxu0 0
    %1744 = vmatprep.subr.bf16.mxu0 %v1217
    %1745 = vmatpush1.bf16.msra.mxu0 %v1214
    %1746 = vmatprep.subr.bf16.mxu0 0
    %1747 = vmatpush2.bf16.msra.mxu0 0
    %1748 = vmatprep.subr.bf16.mxu0 0
    %1749 = vmatpush2.bf16.msra.mxu0 0
    %1750 = vmatprep.subr.bf16.mxu0 0
    %1751 = vmatpush2.bf16.msra.mxu0 0
    %1752 = vmatprep.subr.bf16.mxu0 0
    %1753 = vmatpush2.bf16.msra.mxu0 0
    %1754 = vmatprep.subr.bf16.mxu0 0
    %1755 = vmatpush2.bf16.msra.mxu0 0
    %1756 = vmatprep.subr.bf16.mxu0 0
    %1757 = vmatpush2.bf16.msra.mxu0 0
    %1758 = vmatprep.subr.bf16.mxu0 0
    %1759 = vmatpush2.bf16.msra.mxu0 0
    %1760 = vmatprep.subr.bf16.mxu0 0
    %1761 = vmatpush2.bf16.msra.mxu0 0
    %1762 = vmatprep.mubr.bf16.mxu0 0
    %1763 = vmatmul.mubr.bf16.gmra.mxu0 %v1159
    %v1764 = vpop.f32.mrf.mxu0
    %v1765 = vadd.f32 %v1097, %v1764
    %v1766 = vpop.f32.mrf.mxu0
    %v1767 = vadd.f32 %v1101, %v1766
    %v1768 = vpop.f32.mrf.mxu0
    %v1769 = vadd.f32 %v1097, %v1768
    %v1770 = vpop.f32.mrf.mxu0
    %v1771 = vadd.f32 %v1101, %v1770
    %1772 = vmatprep.mubr.bf16.mxu0 0
    %1773 = vmatmul.mubr.bf16.gmra.mxu0 %v1162
    %v1774 = vpop.f32.mrf.mxu0
    %v1775 = vadd.f32 %v1097, %v1774
    %v1776 = vpop.f32.mrf.mxu0
    %v1777 = vadd.f32 %v1101, %v1776
    %v1778 = vpop.f32.mrf.mxu0
    %v1779 = vadd.f32 %v1097, %v1778
    %v1780 = vpop.f32.mrf.mxu0
    %v1781 = vadd.f32 %v1101, %v1780
    %1782 = vmatprep.mubr.bf16.mxu0 0
    %1783 = vmatmul.mubr.bf16.gmra.mxu0 %v1165
    %v1784 = vpop.f32.mrf.mxu0
    %v1785 = vadd.f32 %v1097, %v1784
    %v1786 = vpop.f32.mrf.mxu0
    %v1787 = vadd.f32 %v1101, %v1786
    %v1788 = vpop.f32.mrf.mxu0
    %v1789 = vadd.f32 %v1097, %v1788
    %v1790 = vpop.f32.mrf.mxu0
    %v1791 = vadd.f32 %v1101, %v1790
    %1792 = vmatprep.mubr.bf16.mxu0 0
    %1793 = vmatmul.mubr.bf16.gmra.mxu0 %v1168
    %v1794 = vpop.f32.mrf.mxu0
    %v1795 = vadd.f32 %v1097, %v1794
    %v1796 = vpop.f32.mrf.mxu0
    %v1797 = vadd.f32 %v1101, %v1796
    %v1798 = vpop.f32.mrf.mxu0
    %v1799 = vadd.f32 %v1097, %v1798
    %v1800 = vpop.f32.mrf.mxu0
    %v1801 = vadd.f32 %v1101, %v1800
    %1802 = vdwg.mxu0
    %v1803 = vmax.f32 %v1254, 0.0
    %v1804 = vmax.f32 %v1256, 0.0
    %v1805 = vmax.f32 %v1327, 0.0
    %v1806 = vmax.f32 %v1329, 0.0
    %v1807 = vmax.f32 %v1400, 0.0
    %v1808 = vmax.f32 %v1402, 0.0
    %v1809 = vmax.f32 %v1473, 0.0
    %v1810 = vmax.f32 %v1475, 0.0
    %v1811 = vmax.f32 %v1546, 0.0
    %v1812 = vmax.f32 %v1548, 0.0
    %v1813 = vmax.f32 %v1619, 0.0
    %v1814 = vmax.f32 %v1621, 0.0
    %v1815 = vmax.f32 %v1692, 0.0
    %v1816 = vmax.f32 %v1694, 0.0
    %v1817 = vmax.f32 %v1765, 0.0
    %v1818 = vmax.f32 %v1767, 0.0
    %v1819 = vmax.f32 %v1258, 0.0
    %v1820 = vmax.f32 %v1260, 0.0
    %v1821 = vmax.f32 %v1331, 0.0
    %v1822 = vmax.f32 %v1333, 0.0
    %v1823 = vmax.f32 %v1404, 0.0
    %v1824 = vmax.f32 %v1406, 0.0
    %v1825 = vmax.f32 %v1477, 0.0
    %v1826 = vmax.f32 %v1479, 0.0
    %v1827 = vmax.f32 %v1550, 0.0
    %v1828 = vmax.f32 %v1552, 0.0
    %v1829 = vmax.f32 %v1623, 0.0
    %v1830 = vmax.f32 %v1625, 0.0
    %v1831 = vmax.f32 %v1696, 0.0
    %v1832 = vmax.f32 %v1698, 0.0
    %v1833 = vmax.f32 %v1769, 0.0
    %v1834 = vmax.f32 %v1771, 0.0
    %v1835 = vmax.f32 %v1264, 0.0
    %v1836 = vmax.f32 %v1266, 0.0
    %v1837 = vmax.f32 %v1337, 0.0
    %v1838 = vmax.f32 %v1339, 0.0
    %v1839 = vmax.f32 %v1410, 0.0
    %v1840 = vmax.f32 %v1412, 0.0
    %v1841 = vmax.f32 %v1483, 0.0
    %v1842 = vmax.f32 %v1485, 0.0
    %v1843 = vmax.f32 %v1556, 0.0
    %v1844 = vmax.f32 %v1558, 0.0
    %v1845 = vmax.f32 %v1629, 0.0
    %v1846 = vmax.f32 %v1631, 0.0
    %v1847 = vmax.f32 %v1702, 0.0
    %v1848 = vmax.f32 %v1704, 0.0
    %v1849 = vmax.f32 %v1775, 0.0
    %v1850 = vmax.f32 %v1777, 0.0
    %v1851 = vmax.f32 %v1268, 0.0
    %v1852 = vmax.f32 %v1270, 0.0
    %v1853 = vmax.f32 %v1341, 0.0
    %v1854 = vmax.f32 %v1343, 0.0
    %v1855 = vmax.f32 %v1414, 0.0
    %v1856 = vmax.f32 %v1416, 0.0
    %v1857 = vmax.f32 %v1487, 0.0
    %v1858 = vmax.f32 %v1489, 0.0
    %v1859 = vmax.f32 %v1560, 0.0
    %v1860 = vmax.f32 %v1562, 0.0
    %v1861 = vmax.f32 %v1633, 0.0
    %v1862 = vmax.f32 %v1635, 0.0
    %v1863 = vmax.f32 %v1706, 0.0
    %v1864 = vmax.f32 %v1708, 0.0
    %v1865 = vmax.f32 %v1779, 0.0
    %v1866 = vmax.f32 %v1781, 0.0
    %v1867 = vmax.f32 %v1274, 0.0
    %v1868 = vmax.f32 %v1276, 0.0
    %v1869 = vmax.f32 %v1347, 0.0
    %v1870 = vmax.f32 %v1349, 0.0
    %v1871 = vmax.f32 %v1420, 0.0
    %v1872 = vmax.f32 %v1422, 0.0
    %v1873 = vmax.f32 %v1493, 0.0
    %v1874 = vmax.f32 %v1495, 0.0
    %v1875 = vmax.f32 %v1566, 0.0
    %v1876 = vmax.f32 %v1568, 0.0
    %v1877 = vmax.f32 %v1639, 0.0
    %v1878 = vmax.f32 %v1641, 0.0
    %v1879 = vmax.f32 %v1712, 0.0
    %v1880 = vmax.f32 %v1714, 0.0
    %v1881 = vmax.f32 %v1785, 0.0
    %v1882 = vmax.f32 %v1787, 0.0
    %v1883 = vmax.f32 %v1278, 0.0
    %v1884 = vmax.f32 %v1280, 0.0
    %v1885 = vmax.f32 %v1351, 0.0
    %v1886 = vmax.f32 %v1353, 0.0
    %v1887 = vmax.f32 %v1424, 0.0
    %v1888 = vmax.f32 %v1426, 0.0
    %v1889 = vmax.f32 %v1497, 0.0
    %v1890 = vmax.f32 %v1499, 0.0
    %v1891 = vmax.f32 %v1570, 0.0
    %v1892 = vmax.f32 %v1572, 0.0
    %v1893 = vmax.f32 %v1643, 0.0
    %v1894 = vmax.f32 %v1645, 0.0
    %v1895 = vmax.f32 %v1716, 0.0
    %v1896 = vmax.f32 %v1718, 0.0
    %v1897 = vmax.f32 %v1789, 0.0
    %v1898 = vmax.f32 %v1791, 0.0
    %v1899 = vmax.f32 %v1284, 0.0
    %v1900 = vmax.f32 %v1286, 0.0
    %v1901 = vmax.f32 %v1357, 0.0
    %v1902 = vmax.f32 %v1359, 0.0
    %v1903 = vmax.f32 %v1430, 0.0
    %v1904 = vmax.f32 %v1432, 0.0
    %v1905 = vmax.f32 %v1503, 0.0
    %v1906 = vmax.f32 %v1505, 0.0
    %v1907 = vmax.f32 %v1576, 0.0
    %v1908 = vmax.f32 %v1578, 0.0
    %v1909 = vmax.f32 %v1649, 0.0
    %v1910 = vmax.f32 %v1651, 0.0
    %v1911 = vmax.f32 %v1722, 0.0
    %v1912 = vmax.f32 %v1724, 0.0
    %v1913 = vmax.f32 %v1795, 0.0
    %v1914 = vmax.f32 %v1797, 0.0
    %v1915 = vmax.f32 %v1288, 0.0
    %v1916 = vmax.f32 %v1290, 0.0
    %v1917 = vmax.f32 %v1361, 0.0
    %v1918 = vmax.f32 %v1363, 0.0
    %v1919 = vmax.f32 %v1434, 0.0
    %v1920 = vmax.f32 %v1436, 0.0
    %v1921 = vmax.f32 %v1507, 0.0
    %v1922 = vmax.f32 %v1509, 0.0
    %v1923 = vmax.f32 %v1580, 0.0
    %v1924 = vmax.f32 %v1582, 0.0
    %v1925 = vmax.f32 %v1653, 0.0
    %v1926 = vmax.f32 %v1655, 0.0
    %v1927 = vmax.f32 %v1726, 0.0
    %v1928 = vmax.f32 %v1728, 0.0
    %v1929 = vmax.f32 %v1799, 0.0
    %v1930 = vmax.f32 %v1801, 0.0
    %v1931 = vpack.c.bf16 %v1819, %v1803
    %v1932 = vpack.c.bf16 %v1820, %v1804
    %v1933 = vpack.c.bf16 %v1821, %v1805
    %v1934 = vpack.c.bf16 %v1822, %v1806
    %v1935 = vpack.c.bf16 %v1823, %v1807
    %v1936 = vpack.c.bf16 %v1824, %v1808
    %v1937 = vpack.c.bf16 %v1825, %v1809
    %v1938 = vpack.c.bf16 %v1826, %v1810
    %v1939 = vpack.c.bf16 %v1827, %v1811
    %v1940 = vpack.c.bf16 %v1828, %v1812
    %v1941 = vpack.c.bf16 %v1829, %v1813
    %v1942 = vpack.c.bf16 %v1830, %v1814
    %v1943 = vpack.c.bf16 %v1831, %v1815
    %v1944 = vpack.c.bf16 %v1832, %v1816
    %v1945 = vpack.c.bf16 %v1833, %v1817
    %v1946 = vpack.c.bf16 %v1834, %v1818
    %v1947 = vpack.c.bf16 %v1851, %v1835
    %v1948 = vpack.c.bf16 %v1852, %v1836
    %v1949 = vpack.c.bf16 %v1853, %v1837
    %v1950 = vpack.c.bf16 %v1854, %v1838
    %v1951 = vpack.c.bf16 %v1855, %v1839
    %v1952 = vpack.c.bf16 %v1856, %v1840
    %v1953 = vpack.c.bf16 %v1857, %v1841
    %v1954 = vpack.c.bf16 %v1858, %v1842
    %v1955 = vpack.c.bf16 %v1859, %v1843
    %v1956 = vpack.c.bf16 %v1860, %v1844
    %v1957 = vpack.c.bf16 %v1861, %v1845
    %v1958 = vpack.c.bf16 %v1862, %v1846
    %v1959 = vpack.c.bf16 %v1863, %v1847
    %v1960 = vpack.c.bf16 %v1864, %v1848
    %v1961 = vpack.c.bf16 %v1865, %v1849
    %v1962 = vpack.c.bf16 %v1866, %v1850
    %v1963 = vpack.c.bf16 %v1883, %v1867
    %v1964 = vpack.c.bf16 %v1884, %v1868
    %v1965 = vpack.c.bf16 %v1885, %v1869
    %v1966 = vpack.c.bf16 %v1886, %v1870
    %v1967 = vpack.c.bf16 %v1887, %v1871
    %v1968 = vpack.c.bf16 %v1888, %v1872
    %v1969 = vpack.c.bf16 %v1889, %v1873
    %v1970 = vpack.c.bf16 %v1890, %v1874
    %v1971 = vpack.c.bf16 %v1891, %v1875
    %v1972 = vpack.c.bf16 %v1892, %v1876
    %v1973 = vpack.c.bf16 %v1893, %v1877
    %v1974 = vpack.c.bf16 %v1894, %v1878
    %v1975 = vpack.c.bf16 %v1895, %v1879
    %v1976 = vpack.c.bf16 %v1896, %v1880
    %v1977 = vpack.c.bf16 %v1897, %v1881
    %v1978 = vpack.c.bf16 %v1898, %v1882
    %v1979 = vpack.c.bf16 %v1915, %v1899
    %v1980 = vpack.c.bf16 %v1916, %v1900
    %v1981 = vpack.c.bf16 %v1917, %v1901
    %v1982 = vpack.c.bf16 %v1918, %v1902
    %v1983 = vpack.c.bf16 %v1919, %v1903
    %v1984 = vpack.c.bf16 %v1920, %v1904
    %v1985 = vpack.c.bf16 %v1921, %v1905
    %v1986 = vpack.c.bf16 %v1922, %v1906
    %v1987 = vpack.c.bf16 %v1923, %v1907
    %v1988 = vpack.c.bf16 %v1924, %v1908
    %v1989 = vpack.c.bf16 %v1925, %v1909
    %v1990 = vpack.c.bf16 %v1926, %v1910
    %v1991 = vpack.c.bf16 %v1927, %v1911
    %v1992 = vpack.c.bf16 %v1928, %v1912
    %v1993 = vpack.c.bf16 %v1929, %v1913
    %v1994 = vpack.c.bf16 %v1930, %v1914
    %v1995 = vld [vmem:[#allocation3] sm:$0xff]
    %v1996 = vld [vmem:[#allocation3 + $0x8] sm:$0xff]
    %v1997 = vld [vmem:[#allocation3 + $0x10] sm:$0xff]
    %v1998 = vld [vmem:[#allocation3 + $0x18] sm:$0xff]
    %v1999 = vld [vmem:[#allocation3 + $0x20] sm:$0xff]
    %v2000 = vld [vmem:[#allocation3 + $0x28] sm:$0xff]
    %v2001 = vld [vmem:[#allocation3 + $0x30] sm:$0xff]
    %v2002 = vld [vmem:[#allocation3 + $0x38] sm:$0xff]
    %v2003 = vld [vmem:[%s10] sm:$0x1]
    %v2005 = vlaneseq
    %v2006 = vshrl.u32 %v2005, 7
    %v2007 = vsub.s32 0, %v2006
    %v2008 = vrot.slane %v2003, %v2007
    %v2018 = vunpack.c.l.b16 %v1995
    %v2019 = vunpack.c.h.b16 %v1995
    %v2020 = vunpack.c.l.b16 %v1996
    %v2021 = vunpack.c.h.b16 %v1996
    %v2022 = vunpack.c.l.b16 %v1997
    %v2023 = vunpack.c.h.b16 %v1997
    %v2024 = vunpack.c.l.b16 %v1998
    %v2025 = vunpack.c.h.b16 %v1998
    %v2026 = vunpack.c.l.b16 %v1999
    %v2027 = vunpack.c.h.b16 %v1999
    %v2028 = vunpack.c.l.b16 %v2000
    %v2029 = vunpack.c.h.b16 %v2000
    %v2030 = vunpack.c.l.b16 %v2001
    %v2031 = vunpack.c.h.b16 %v2001
    %v2032 = vunpack.c.l.b16 %v2002
    %v2033 = vunpack.c.h.b16 %v2002
    %v2034 = vpack.c.b16 %v2018, %v2018
    %v2035 = vpack.c.b16 %v2019, %v2019
    %v2036 = vpack.c.b16 %v2020, %v2020
    %v2037 = vpack.c.b16 %v2021, %v2021
    %v2038 = vpack.c.b16 %v2022, %v2022
    %v2039 = vpack.c.b16 %v2023, %v2023
    %v2040 = vpack.c.b16 %v2024, %v2024
    %v2041 = vpack.c.b16 %v2025, %v2025
    %v2042 = vpack.c.b16 %v2026, %v2026
    %v2043 = vpack.c.b16 %v2027, %v2027
    %v2044 = vpack.c.b16 %v2028, %v2028
    %v2045 = vpack.c.b16 %v2029, %v2029
    %v2046 = vpack.c.b16 %v2030, %v2030
    %v2047 = vpack.c.b16 %v2031, %v2031
    %v2048 = vpack.c.b16 %v2032, %v2032
    %v2049 = vpack.c.b16 %v2033, %v2033
    %2066 = vmatprep.subr.bf16.mxu0 0
    %2067 = vmatpush1.bf16.xpose.msra.mxu0 0
    %2068 = vmatprep.subr.bf16.mxu0 0
    %2069 = vmatpush1.bf16.xpose.msra.mxu0 0
    %2070 = vmatprep.subr.bf16.mxu0 0
    %2071 = vmatpush1.bf16.xpose.msra.mxu0 0
    %2072 = vmatprep.subr.bf16.mxu0 0
    %2073 = vmatpush1.bf16.xpose.msra.mxu0 0
    %2074 = vmatprep.subr.bf16.mxu0 0
    %2075 = vmatpush1.bf16.xpose.msra.mxu0 0
    %2076 = vmatprep.subr.bf16.mxu0 0
    %2077 = vmatpush1.bf16.xpose.msra.mxu0 0
    %2078 = vmatprep.subr.bf16.mxu0 0
    %2079 = vmatpush1.bf16.xpose.msra.mxu0 0
    %2080 = vmatprep.subr.bf16.mxu0 %v2035
    %2081 = vmatpush1.bf16.xpose.msra.mxu0 %v2034
    %2082 = vmatprep.subr.bf16.mxu0 0
    %2083 = vmatpush2.bf16.xpose.msra.mxu0 0
    %2084 = vmatprep.subr.bf16.mxu0 0
    %2085 = vmatpush2.bf16.xpose.msra.mxu0 0
    %2086 = vmatprep.subr.bf16.mxu0 0
    %2087 = vmatpush2.bf16.xpose.msra.mxu0 0
    %2088 = vmatprep.subr.bf16.mxu0 0
    %2089 = vmatpush2.bf16.xpose.msra.mxu0 0
    %2090 = vmatprep.subr.bf16.mxu0 0
    %2091 = vmatpush2.bf16.xpose.msra.mxu0 0
    %2092 = vmatprep.subr.bf16.mxu0 0
    %2093 = vmatpush2.bf16.xpose.msra.mxu0 0
    %2094 = vmatprep.subr.bf16.mxu0 0
    %2095 = vmatpush2.bf16.xpose.msra.mxu0 0
    %2096 = vmatprep.subr.bf16.mxu0 0
    %2097 = vmatpush2.bf16.xpose.msra.mxu0 0
    %2098 = vmatprep.mubr.bf16.mxu0 %v1932
    %2099 = vmatmul.mubr.bf16.gmra.mxu0 %v1931
    %v2100 = vpop.f32.mrf.mxu0
    %v2101 = vadd.f32 %v2008, %v2100
    %v2102 = vpop.f32.mrf.mxu0
    %v2103 = vpop.f32.mrf.mxu0
    %v2104 = vadd.f32 %v2008, %v2103
    %v2105 = vpop.f32.mrf.mxu0
    %2106 = vmatprep.mubr.bf16.mxu0 %v1948
    %2107 = vmatmul.mubr.bf16.gmra.mxu0 %v1947
    %v2108 = vpop.f32.mrf.mxu0
    %v2109 = vadd.f32 %v2008, %v2108
    %v2110 = vpop.f32.mrf.mxu0
    %v2111 = vpop.f32.mrf.mxu0
    %v2112 = vadd.f32 %v2008, %v2111
    %v2113 = vpop.f32.mrf.mxu0
    %2114 = vmatprep.mubr.bf16.mxu0 %v1964
    %2115 = vmatmul.mubr.bf16.gmra.mxu0 %v1963
    %v2116 = vpop.f32.mrf.mxu0
    %v2117 = vadd.f32 %v2008, %v2116
    %v2118 = vpop.f32.mrf.mxu0
    %v2119 = vpop.f32.mrf.mxu0
    %v2120 = vadd.f32 %v2008, %v2119
    %v2121 = vpop.f32.mrf.mxu0
    %2122 = vmatprep.mubr.bf16.mxu0 %v1980
    %2123 = vmatmul.mubr.bf16.gmra.mxu0 %v1979
    %v2124 = vpop.f32.mrf.mxu0
    %v2125 = vadd.f32 %v2008, %v2124
    %v2126 = vpop.f32.mrf.mxu0
    %v2127 = vpop.f32.mrf.mxu0
    %v2128 = vadd.f32 %v2008, %v2127
    %v2129 = vpop.f32.mrf.mxu0
    %2130 = vdwg.mxu0
    %2131 = vmatprep.subr.bf16.mxu0 0
    %2132 = vmatpush1.bf16.xpose.msra.mxu0 0
    %2133 = vmatprep.subr.bf16.mxu0 0
    %2134 = vmatpush1.bf16.xpose.msra.mxu0 0
    %2135 = vmatprep.subr.bf16.mxu0 0
    %2136 = vmatpush1.bf16.xpose.msra.mxu0 0
    %2137 = vmatprep.subr.bf16.mxu0 0
    %2138 = vmatpush1.bf16.xpose.msra.mxu0 0
    %2139 = vmatprep.subr.bf16.mxu0 0
    %2140 = vmatpush1.bf16.xpose.msra.mxu0 0
    %2141 = vmatprep.subr.bf16.mxu0 0
    %2142 = vmatpush1.bf16.xpose.msra.mxu0 0
    %2143 = vmatprep.subr.bf16.mxu0 0
    %2144 = vmatpush1.bf16.xpose.msra.mxu0 0
    %2145 = vmatprep.subr.bf16.mxu0 %v2037
    %2146 = vmatpush1.bf16.xpose.msra.mxu0 %v2036
    %2147 = vmatprep.subr.bf16.mxu0 0
    %2148 = vmatpush2.bf16.xpose.msra.mxu0 0
    %2149 = vmatprep.subr.bf16.mxu0 0
    %2150 = vmatpush2.bf16.xpose.msra.mxu0 0
    %2151 = vmatprep.subr.bf16.mxu0 0
    %2152 = vmatpush2.bf16.xpose.msra.mxu0 0
    %2153 = vmatprep.subr.bf16.mxu0 0
    %2154 = vmatpush2.bf16.xpose.msra.mxu0 0
    %2155 = vmatprep.subr.bf16.mxu0 0
    %2156 = vmatpush2.bf16.xpose.msra.mxu0 0
    %2157 = vmatprep.subr.bf16.mxu0 0
    %2158 = vmatpush2.bf16.xpose.msra.mxu0 0
    %2159 = vmatprep.subr.bf16.mxu0 0
    %2160 = vmatpush2.bf16.xpose.msra.mxu0 0
    %2161 = vmatprep.subr.bf16.mxu0 0
    %2162 = vmatpush2.bf16.xpose.msra.mxu0 0
    %2163 = vmatprep.mubr.bf16.mxu0 %v1934
    %2164 = vmatmul.mubr.bf16.gmra.mxu0 %v1933
    %v2165 = vpop.f32.mrf.mxu0
    %v2166 = vadd.f32 %v2101, %v2165
    %v2167 = vpop.f32.mrf.mxu0
    %v2168 = vpop.f32.mrf.mxu0
    %v2169 = vadd.f32 %v2104, %v2168
    %v2170 = vpop.f32.mrf.mxu0
    %2171 = vmatprep.mubr.bf16.mxu0 %v1950
    %2172 = vmatmul.mubr.bf16.gmra.mxu0 %v1949
    %v2173 = vpop.f32.mrf.mxu0
    %v2174 = vadd.f32 %v2109, %v2173
    %v2175 = vpop.f32.mrf.mxu0
    %v2176 = vpop.f32.mrf.mxu0
    %v2177 = vadd.f32 %v2112, %v2176
    %v2178 = vpop.f32.mrf.mxu0
    %2179 = vmatprep.mubr.bf16.mxu0 %v1966
    %2180 = vmatmul.mubr.bf16.gmra.mxu0 %v1965
    %v2181 = vpop.f32.mrf.mxu0
    %v2182 = vadd.f32 %v2117, %v2181
    %v2183 = vpop.f32.mrf.mxu0
    %v2184 = vpop.f32.mrf.mxu0
    %v2185 = vadd.f32 %v2120, %v2184
    %v2186 = vpop.f32.mrf.mxu0
    %2187 = vmatprep.mubr.bf16.mxu0 %v1982
    %2188 = vmatmul.mubr.bf16.gmra.mxu0 %v1981
    %v2189 = vpop.f32.mrf.mxu0
    %v2190 = vadd.f32 %v2125, %v2189
    %v2191 = vpop.f32.mrf.mxu0
    %v2192 = vpop.f32.mrf.mxu0
    %v2193 = vadd.f32 %v2128, %v2192
    %v2194 = vpop.f32.mrf.mxu0
    %2195 = vdwg.mxu0
    %2196 = vmatprep.subr.bf16.mxu0 0
    %2197 = vmatpush1.bf16.xpose.msra.mxu0 0
    %2198 = vmatprep.subr.bf16.mxu0 0
    %2199 = vmatpush1.bf16.xpose.msra.mxu0 0
    %2200 = vmatprep.subr.bf16.mxu0 0
    %2201 = vmatpush1.bf16.xpose.msra.mxu0 0
    %2202 = vmatprep.subr.bf16.mxu0 0
    %2203 = vmatpush1.bf16.xpose.msra.mxu0 0
    %2204 = vmatprep.subr.bf16.mxu0 0
    %2205 = vmatpush1.bf16.xpose.msra.mxu0 0
    %2206 = vmatprep.subr.bf16.mxu0 0
    %2207 = vmatpush1.bf16.xpose.msra.mxu0 0
    %2208 = vmatprep.subr.bf16.mxu0 0
    %2209 = vmatpush1.bf16.xpose.msra.mxu0 0
    %2210 = vmatprep.subr.bf16.mxu0 %v2039
    %2211 = vmatpush1.bf16.xpose.msra.mxu0 %v2038
    %2212 = vmatprep.subr.bf16.mxu0 0
    %2213 = vmatpush2.bf16.xpose.msra.mxu0 0
    %2214 = vmatprep.subr.bf16.mxu0 0
    %2215 = vmatpush2.bf16.xpose.msra.mxu0 0
    %2216 = vmatprep.subr.bf16.mxu0 0
    %2217 = vmatpush2.bf16.xpose.msra.mxu0 0
    %2218 = vmatprep.subr.bf16.mxu0 0
    %2219 = vmatpush2.bf16.xpose.msra.mxu0 0
    %2220 = vmatprep.subr.bf16.mxu0 0
    %2221 = vmatpush2.bf16.xpose.msra.mxu0 0
    %2222 = vmatprep.subr.bf16.mxu0 0
    %2223 = vmatpush2.bf16.xpose.msra.mxu0 0
    %2224 = vmatprep.subr.bf16.mxu0 0
    %2225 = vmatpush2.bf16.xpose.msra.mxu0 0
    %2226 = vmatprep.subr.bf16.mxu0 0
    %2227 = vmatpush2.bf16.xpose.msra.mxu0 0
    %2228 = vmatprep.mubr.bf16.mxu0 %v1936
    %2229 = vmatmul.mubr.bf16.gmra.mxu0 %v1935
    %v2230 = vpop.f32.mrf.mxu0
    %v2231 = vadd.f32 %v2166, %v2230
    %v2232 = vpop.f32.mrf.mxu0
    %v2233 = vpop.f32.mrf.mxu0
    %v2234 = vadd.f32 %v2169, %v2233
    %v2235 = vpop.f32.mrf.mxu0
    %2236 = vmatprep.mubr.bf16.mxu0 %v1952
    %2237 = vmatmul.mubr.bf16.gmra.mxu0 %v1951
    %v2238 = vpop.f32.mrf.mxu0
    %v2239 = vadd.f32 %v2174, %v2238
    %v2240 = vpop.f32.mrf.mxu0
    %v2241 = vpop.f32.mrf.mxu0
    %v2242 = vadd.f32 %v2177, %v2241
    %v2243 = vpop.f32.mrf.mxu0
    %2244 = vmatprep.mubr.bf16.mxu0 %v1968
    %2245 = vmatmul.mubr.bf16.gmra.mxu0 %v1967
    %v2246 = vpop.f32.mrf.mxu0
    %v2247 = vadd.f32 %v2182, %v2246
    %v2248 = vpop.f32.mrf.mxu0
    %v2249 = vpop.f32.mrf.mxu0
    %v2250 = vadd.f32 %v2185, %v2249
    %v2251 = vpop.f32.mrf.mxu0
    %2252 = vmatprep.mubr.bf16.mxu0 %v1984
    %2253 = vmatmul.mubr.bf16.gmra.mxu0 %v1983
    %v2254 = vpop.f32.mrf.mxu0
    %v2255 = vadd.f32 %v2190, %v2254
    %v2256 = vpop.f32.mrf.mxu0
    %v2257 = vpop.f32.mrf.mxu0
    %v2258 = vadd.f32 %v2193, %v2257
    %v2259 = vpop.f32.mrf.mxu0
    %2260 = vdwg.mxu0
    %2261 = vmatprep.subr.bf16.mxu0 0
    %2262 = vmatpush1.bf16.xpose.msra.mxu0 0
    %2263 = vmatprep.subr.bf16.mxu0 0
    %2264 = vmatpush1.bf16.xpose.msra.mxu0 0
    %2265 = vmatprep.subr.bf16.mxu0 0
    %2266 = vmatpush1.bf16.xpose.msra.mxu0 0
    %2267 = vmatprep.subr.bf16.mxu0 0
    %2268 = vmatpush1.bf16.xpose.msra.mxu0 0
    %2269 = vmatprep.subr.bf16.mxu0 0
    %2270 = vmatpush1.bf16.xpose.msra.mxu0 0
    %2271 = vmatprep.subr.bf16.mxu0 0
    %2272 = vmatpush1.bf16.xpose.msra.mxu0 0
    %2273 = vmatprep.subr.bf16.mxu0 0
    %2274 = vmatpush1.bf16.xpose.msra.mxu0 0
    %2275 = vmatprep.subr.bf16.mxu0 %v2041
    %2276 = vmatpush1.bf16.xpose.msra.mxu0 %v2040
    %2277 = vmatprep.subr.bf16.mxu0 0
    %2278 = vmatpush2.bf16.xpose.msra.mxu0 0
    %2279 = vmatprep.subr.bf16.mxu0 0
    %2280 = vmatpush2.bf16.xpose.msra.mxu0 0
    %2281 = vmatprep.subr.bf16.mxu0 0
    %2282 = vmatpush2.bf16.xpose.msra.mxu0 0
    %2283 = vmatprep.subr.bf16.mxu0 0
    %2284 = vmatpush2.bf16.xpose.msra.mxu0 0
    %2285 = vmatprep.subr.bf16.mxu0 0
    %2286 = vmatpush2.bf16.xpose.msra.mxu0 0
    %2287 = vmatprep.subr.bf16.mxu0 0
    %2288 = vmatpush2.bf16.xpose.msra.mxu0 0
    %2289 = vmatprep.subr.bf16.mxu0 0
    %2290 = vmatpush2.bf16.xpose.msra.mxu0 0
    %2291 = vmatprep.subr.bf16.mxu0 0
    %2292 = vmatpush2.bf16.xpose.msra.mxu0 0
    %2293 = vmatprep.mubr.bf16.mxu0 %v1938
    %2294 = vmatmul.mubr.bf16.gmra.mxu0 %v1937
    %v2295 = vpop.f32.mrf.mxu0
    %v2296 = vadd.f32 %v2231, %v2295
    %v2297 = vpop.f32.mrf.mxu0
    %v2298 = vpop.f32.mrf.mxu0
    %v2299 = vadd.f32 %v2234, %v2298
    %v2300 = vpop.f32.mrf.mxu0
    %2301 = vmatprep.mubr.bf16.mxu0 %v1954
    %2302 = vmatmul.mubr.bf16.gmra.mxu0 %v1953
    %v2303 = vpop.f32.mrf.mxu0
    %v2304 = vadd.f32 %v2239, %v2303
    %v2305 = vpop.f32.mrf.mxu0
    %v2306 = vpop.f32.mrf.mxu0
    %v2307 = vadd.f32 %v2242, %v2306
    %v2308 = vpop.f32.mrf.mxu0
    %2309 = vmatprep.mubr.bf16.mxu0 %v1970
    %2310 = vmatmul.mubr.bf16.gmra.mxu0 %v1969
    %v2311 = vpop.f32.mrf.mxu0
    %v2312 = vadd.f32 %v2247, %v2311
    %v2313 = vpop.f32.mrf.mxu0
    %v2314 = vpop.f32.mrf.mxu0
    %v2315 = vadd.f32 %v2250, %v2314
    %v2316 = vpop.f32.mrf.mxu0
    %2317 = vmatprep.mubr.bf16.mxu0 %v1986
    %2318 = vmatmul.mubr.bf16.gmra.mxu0 %v1985
    %v2319 = vpop.f32.mrf.mxu0
    %v2320 = vadd.f32 %v2255, %v2319
    %v2321 = vpop.f32.mrf.mxu0
    %v2322 = vpop.f32.mrf.mxu0
    %v2323 = vadd.f32 %v2258, %v2322
    %v2324 = vpop.f32.mrf.mxu0
    %2325 = vdwg.mxu0
    %2326 = vmatprep.subr.bf16.mxu0 0
    %2327 = vmatpush1.bf16.xpose.msra.mxu0 0
    %2328 = vmatprep.subr.bf16.mxu0 0
    %2329 = vmatpush1.bf16.xpose.msra.mxu0 0
    %2330 = vmatprep.subr.bf16.mxu0 0
    %2331 = vmatpush1.bf16.xpose.msra.mxu0 0
    %2332 = vmatprep.subr.bf16.mxu0 0
    %2333 = vmatpush1.bf16.xpose.msra.mxu0 0
    %2334 = vmatprep.subr.bf16.mxu0 0
    %2335 = vmatpush1.bf16.xpose.msra.mxu0 0
    %2336 = vmatprep.subr.bf16.mxu0 0
    %2337 = vmatpush1.bf16.xpose.msra.mxu0 0
    %2338 = vmatprep.subr.bf16.mxu0 0
    %2339 = vmatpush1.bf16.xpose.msra.mxu0 0
    %2340 = vmatprep.subr.bf16.mxu0 %v2043
    %2341 = vmatpush1.bf16.xpose.msra.mxu0 %v2042
    %2342 = vmatprep.subr.bf16.mxu0 0
    %2343 = vmatpush2.bf16.xpose.msra.mxu0 0
    %2344 = vmatprep.subr.bf16.mxu0 0
    %2345 = vmatpush2.bf16.xpose.msra.mxu0 0
    %2346 = vmatprep.subr.bf16.mxu0 0
    %2347 = vmatpush2.bf16.xpose.msra.mxu0 0
    %2348 = vmatprep.subr.bf16.mxu0 0
    %2349 = vmatpush2.bf16.xpose.msra.mxu0 0
    %2350 = vmatprep.subr.bf16.mxu0 0
    %2351 = vmatpush2.bf16.xpose.msra.mxu0 0
    %2352 = vmatprep.subr.bf16.mxu0 0
    %2353 = vmatpush2.bf16.xpose.msra.mxu0 0
    %2354 = vmatprep.subr.bf16.mxu0 0
    %2355 = vmatpush2.bf16.xpose.msra.mxu0 0
    %2356 = vmatprep.subr.bf16.mxu0 0
    %2357 = vmatpush2.bf16.xpose.msra.mxu0 0
    %2358 = vmatprep.mubr.bf16.mxu0 %v1940
    %2359 = vmatmul.mubr.bf16.gmra.mxu0 %v1939
    %v2360 = vpop.f32.mrf.mxu0
    %v2361 = vadd.f32 %v2296, %v2360
    %v2362 = vpop.f32.mrf.mxu0
    %v2363 = vpop.f32.mrf.mxu0
    %v2364 = vadd.f32 %v2299, %v2363
    %v2365 = vpop.f32.mrf.mxu0
    %2366 = vmatprep.mubr.bf16.mxu0 %v1956
    %2367 = vmatmul.mubr.bf16.gmra.mxu0 %v1955
    %v2368 = vpop.f32.mrf.mxu0
    %v2369 = vadd.f32 %v2304, %v2368
    %v2370 = vpop.f32.mrf.mxu0
    %v2371 = vpop.f32.mrf.mxu0
    %v2372 = vadd.f32 %v2307, %v2371
    %v2373 = vpop.f32.mrf.mxu0
    %2374 = vmatprep.mubr.bf16.mxu0 %v1972
    %2375 = vmatmul.mubr.bf16.gmra.mxu0 %v1971
    %v2376 = vpop.f32.mrf.mxu0
    %v2377 = vadd.f32 %v2312, %v2376
    %v2378 = vpop.f32.mrf.mxu0
    %v2379 = vpop.f32.mrf.mxu0
    %v2380 = vadd.f32 %v2315, %v2379
    %v2381 = vpop.f32.mrf.mxu0
    %2382 = vmatprep.mubr.bf16.mxu0 %v1988
    %2383 = vmatmul.mubr.bf16.gmra.mxu0 %v1987
    %v2384 = vpop.f32.mrf.mxu0
    %v2385 = vadd.f32 %v2320, %v2384
    %v2386 = vpop.f32.mrf.mxu0
    %v2387 = vpop.f32.mrf.mxu0
    %v2388 = vadd.f32 %v2323, %v2387
    %v2389 = vpop.f32.mrf.mxu0
    %2390 = vdwg.mxu0
    %2391 = vmatprep.subr.bf16.mxu0 0
    %2392 = vmatpush1.bf16.xpose.msra.mxu0 0
    %2393 = vmatprep.subr.bf16.mxu0 0
    %2394 = vmatpush1.bf16.xpose.msra.mxu0 0
    %2395 = vmatprep.subr.bf16.mxu0 0
    %2396 = vmatpush1.bf16.xpose.msra.mxu0 0
    %2397 = vmatprep.subr.bf16.mxu0 0
    %2398 = vmatpush1.bf16.xpose.msra.mxu0 0
    %2399 = vmatprep.subr.bf16.mxu0 0
    %2400 = vmatpush1.bf16.xpose.msra.mxu0 0
    %2401 = vmatprep.subr.bf16.mxu0 0
    %2402 = vmatpush1.bf16.xpose.msra.mxu0 0
    %2403 = vmatprep.subr.bf16.mxu0 0
    %2404 = vmatpush1.bf16.xpose.msra.mxu0 0
    %2405 = vmatprep.subr.bf16.mxu0 %v2045
    %2406 = vmatpush1.bf16.xpose.msra.mxu0 %v2044
    %2407 = vmatprep.subr.bf16.mxu0 0
    %2408 = vmatpush2.bf16.xpose.msra.mxu0 0
    %2409 = vmatprep.subr.bf16.mxu0 0
    %2410 = vmatpush2.bf16.xpose.msra.mxu0 0
    %2411 = vmatprep.subr.bf16.mxu0 0
    %2412 = vmatpush2.bf16.xpose.msra.mxu0 0
    %2413 = vmatprep.subr.bf16.mxu0 0
    %2414 = vmatpush2.bf16.xpose.msra.mxu0 0
    %2415 = vmatprep.subr.bf16.mxu0 0
    %2416 = vmatpush2.bf16.xpose.msra.mxu0 0
    %2417 = vmatprep.subr.bf16.mxu0 0
    %2418 = vmatpush2.bf16.xpose.msra.mxu0 0
    %2419 = vmatprep.subr.bf16.mxu0 0
    %2420 = vmatpush2.bf16.xpose.msra.mxu0 0
    %2421 = vmatprep.subr.bf16.mxu0 0
    %2422 = vmatpush2.bf16.xpose.msra.mxu0 0
    %2423 = vmatprep.mubr.bf16.mxu0 %v1942
    %2424 = vmatmul.mubr.bf16.gmra.mxu0 %v1941
    %v2425 = vpop.f32.mrf.mxu0
    %v2426 = vadd.f32 %v2361, %v2425
    %v2427 = vpop.f32.mrf.mxu0
    %v2428 = vpop.f32.mrf.mxu0
    %v2429 = vadd.f32 %v2364, %v2428
    %v2430 = vpop.f32.mrf.mxu0
    %2431 = vmatprep.mubr.bf16.mxu0 %v1958
    %2432 = vmatmul.mubr.bf16.gmra.mxu0 %v1957
    %v2433 = vpop.f32.mrf.mxu0
    %v2434 = vadd.f32 %v2369, %v2433
    %v2435 = vpop.f32.mrf.mxu0
    %v2436 = vpop.f32.mrf.mxu0
    %v2437 = vadd.f32 %v2372, %v2436
    %v2438 = vpop.f32.mrf.mxu0
    %2439 = vmatprep.mubr.bf16.mxu0 %v1974
    %2440 = vmatmul.mubr.bf16.gmra.mxu0 %v1973
    %v2441 = vpop.f32.mrf.mxu0
    %v2442 = vadd.f32 %v2377, %v2441
    %v2443 = vpop.f32.mrf.mxu0
    %v2444 = vpop.f32.mrf.mxu0
    %v2445 = vadd.f32 %v2380, %v2444
    %v2446 = vpop.f32.mrf.mxu0
    %2447 = vmatprep.mubr.bf16.mxu0 %v1990
    %2448 = vmatmul.mubr.bf16.gmra.mxu0 %v1989
    %v2449 = vpop.f32.mrf.mxu0
    %v2450 = vadd.f32 %v2385, %v2449
    %v2451 = vpop.f32.mrf.mxu0
    %v2452 = vpop.f32.mrf.mxu0
    %v2453 = vadd.f32 %v2388, %v2452
    %v2454 = vpop.f32.mrf.mxu0
    %2455 = vdwg.mxu0
    %2456 = vmatprep.subr.bf16.mxu0 0
    %2457 = vmatpush1.bf16.xpose.msra.mxu0 0
    %2458 = vmatprep.subr.bf16.mxu0 0
    %2459 = vmatpush1.bf16.xpose.msra.mxu0 0
    %2460 = vmatprep.subr.bf16.mxu0 0
    %2461 = vmatpush1.bf16.xpose.msra.mxu0 0
    %2462 = vmatprep.subr.bf16.mxu0 0
    %2463 = vmatpush1.bf16.xpose.msra.mxu0 0
    %2464 = vmatprep.subr.bf16.mxu0 0
    %2465 = vmatpush1.bf16.xpose.msra.mxu0 0
    %2466 = vmatprep.subr.bf16.mxu0 0
    %2467 = vmatpush1.bf16.xpose.msra.mxu0 0
    %2468 = vmatprep.subr.bf16.mxu0 0
    %2469 = vmatpush1.bf16.xpose.msra.mxu0 0
    %2470 = vmatprep.subr.bf16.mxu0 %v2047
    %2471 = vmatpush1.bf16.xpose.msra.mxu0 %v2046
    %2472 = vmatprep.subr.bf16.mxu0 0
    %2473 = vmatpush2.bf16.xpose.msra.mxu0 0
    %2474 = vmatprep.subr.bf16.mxu0 0
    %2475 = vmatpush2.bf16.xpose.msra.mxu0 0
    %2476 = vmatprep.subr.bf16.mxu0 0
    %2477 = vmatpush2.bf16.xpose.msra.mxu0 0
    %2478 = vmatprep.subr.bf16.mxu0 0
    %2479 = vmatpush2.bf16.xpose.msra.mxu0 0
    %2480 = vmatprep.subr.bf16.mxu0 0
    %2481 = vmatpush2.bf16.xpose.msra.mxu0 0
    %2482 = vmatprep.subr.bf16.mxu0 0
    %2483 = vmatpush2.bf16.xpose.msra.mxu0 0
    %2484 = vmatprep.subr.bf16.mxu0 0
    %2485 = vmatpush2.bf16.xpose.msra.mxu0 0
    %2486 = vmatprep.subr.bf16.mxu0 0
    %2487 = vmatpush2.bf16.xpose.msra.mxu0 0
    %2488 = vmatprep.mubr.bf16.mxu0 %v1944
    %2489 = vmatmul.mubr.bf16.gmra.mxu0 %v1943
    %v2490 = vpop.f32.mrf.mxu0
    %v2491 = vadd.f32 %v2426, %v2490
    %v2492 = vpop.f32.mrf.mxu0
    %v2493 = vpop.f32.mrf.mxu0
    %v2494 = vadd.f32 %v2429, %v2493
    %v2495 = vpop.f32.mrf.mxu0
    %2496 = vmatprep.mubr.bf16.mxu0 %v1960
    %2497 = vmatmul.mubr.bf16.gmra.mxu0 %v1959
    %v2498 = vpop.f32.mrf.mxu0
    %v2499 = vadd.f32 %v2434, %v2498
    %v2500 = vpop.f32.mrf.mxu0
    %v2501 = vpop.f32.mrf.mxu0
    %v2502 = vadd.f32 %v2437, %v2501
    %v2503 = vpop.f32.mrf.mxu0
    %2504 = vmatprep.mubr.bf16.mxu0 %v1976
    %2505 = vmatmul.mubr.bf16.gmra.mxu0 %v1975
    %v2506 = vpop.f32.mrf.mxu0
    %v2507 = vadd.f32 %v2442, %v2506
    %v2508 = vpop.f32.mrf.mxu0
    %v2509 = vpop.f32.mrf.mxu0
    %v2510 = vadd.f32 %v2445, %v2509
    %v2511 = vpop.f32.mrf.mxu0
    %2512 = vmatprep.mubr.bf16.mxu0 %v1992
    %2513 = vmatmul.mubr.bf16.gmra.mxu0 %v1991
    %v2514 = vpop.f32.mrf.mxu0
    %v2515 = vadd.f32 %v2450, %v2514
    %v2516 = vpop.f32.mrf.mxu0
    %v2517 = vpop.f32.mrf.mxu0
    %v2518 = vadd.f32 %v2453, %v2517
    %v2519 = vpop.f32.mrf.mxu0
    %2520 = vdwg.mxu0
    %2521 = vmatprep.subr.bf16.mxu0 0
    %2522 = vmatpush1.bf16.xpose.msra.mxu0 0
    %2523 = vmatprep.subr.bf16.mxu0 0
    %2524 = vmatpush1.bf16.xpose.msra.mxu0 0
    %2525 = vmatprep.subr.bf16.mxu0 0
    %2526 = vmatpush1.bf16.xpose.msra.mxu0 0
    %2527 = vmatprep.subr.bf16.mxu0 0
    %2528 = vmatpush1.bf16.xpose.msra.mxu0 0
    %2529 = vmatprep.subr.bf16.mxu0 0
    %2530 = vmatpush1.bf16.xpose.msra.mxu0 0
    %2531 = vmatprep.subr.bf16.mxu0 0
    %2532 = vmatpush1.bf16.xpose.msra.mxu0 0
    %2533 = vmatprep.subr.bf16.mxu0 0
    %2534 = vmatpush1.bf16.xpose.msra.mxu0 0
    %2535 = vmatprep.subr.bf16.mxu0 %v2049
    %2536 = vmatpush1.bf16.xpose.msra.mxu0 %v2048
    %2537 = vmatprep.subr.bf16.mxu0 0
    %2538 = vmatpush2.bf16.xpose.msra.mxu0 0
    %2539 = vmatprep.subr.bf16.mxu0 0
    %2540 = vmatpush2.bf16.xpose.msra.mxu0 0
    %2541 = vmatprep.subr.bf16.mxu0 0
    %2542 = vmatpush2.bf16.xpose.msra.mxu0 0
    %2543 = vmatprep.subr.bf16.mxu0 0
    %2544 = vmatpush2.bf16.xpose.msra.mxu0 0
    %2545 = vmatprep.subr.bf16.mxu0 0
    %2546 = vmatpush2.bf16.xpose.msra.mxu0 0
    %2547 = vmatprep.subr.bf16.mxu0 0
    %2548 = vmatpush2.bf16.xpose.msra.mxu0 0
    %2549 = vmatprep.subr.bf16.mxu0 0
    %2550 = vmatpush2.bf16.xpose.msra.mxu0 0
    %2551 = vmatprep.subr.bf16.mxu0 0
    %2552 = vmatpush2.bf16.xpose.msra.mxu0 0
    %2553 = vmatprep.mubr.bf16.mxu0 %v1946
    %2554 = vmatmul.mubr.bf16.gmra.mxu0 %v1945
    %v2555 = vpop.f32.mrf.mxu0
    %v2556 = vadd.f32 %v2491, %v2555
    %v2557 = vpop.f32.mrf.mxu0
    %v2558 = vpop.f32.mrf.mxu0
    %v2559 = vadd.f32 %v2494, %v2558
    %v2560 = vpop.f32.mrf.mxu0
    %2561 = vmatprep.mubr.bf16.mxu0 %v1962
    %2562 = vmatmul.mubr.bf16.gmra.mxu0 %v1961
    %v2563 = vpop.f32.mrf.mxu0
    %v2564 = vadd.f32 %v2499, %v2563
    %v2565 = vpop.f32.mrf.mxu0
    %v2566 = vpop.f32.mrf.mxu0
    %v2567 = vadd.f32 %v2502, %v2566
    %v2568 = vpop.f32.mrf.mxu0
    %2569 = vmatprep.mubr.bf16.mxu0 %v1978
    %2570 = vmatmul.mubr.bf16.gmra.mxu0 %v1977
    %v2571 = vpop.f32.mrf.mxu0
    %v2572 = vadd.f32 %v2507, %v2571
    %v2573 = vpop.f32.mrf.mxu0
    %v2574 = vpop.f32.mrf.mxu0
    %v2575 = vadd.f32 %v2510, %v2574
    %v2576 = vpop.f32.mrf.mxu0
    %2577 = vmatprep.mubr.bf16.mxu0 %v1994
    %2578 = vmatmul.mubr.bf16.gmra.mxu0 %v1993
    %v2579 = vpop.f32.mrf.mxu0
    %v2580 = vadd.f32 %v2515, %v2579
    %v2581 = vpop.f32.mrf.mxu0
    %v2582 = vpop.f32.mrf.mxu0
    %v2583 = vadd.f32 %v2518, %v2582
    %v2584 = vpop.f32.mrf.mxu0
    %2585 = vdwg.mxu0
    %v2586 = vadd.f32 %v1014, %v2556
    %v2587 = vadd.f32 %v1015, %v2559
    %v2588 = vadd.f32 %v1016, %v2564
    %v2589 = vadd.f32 %v1017, %v2567
    %v2590 = vadd.f32 %v1018, %v2572
    %v2591 = vadd.f32 %v1019, %v2575
    %v2592 = vadd.f32 %v1020, %v2580
    %v2593 = vadd.f32 %v1021, %v2583
    %v2594 = vsel %vm74, %v2586, 0.0
    %2595 = vadd.xlane.f32.xlu0 %v2594
    %v2596 = vpop.xlane.xlu0 %2595
    %v2597 = vsel %vm74, %v2587, 0.0
    %2598 = vadd.xlane.f32.xlu0 %v2597
    %v2599 = vpop.xlane.xlu0 %2598
    %v2600 = vsel %vm74, %v2588, 0.0
    %2601 = vadd.xlane.f32.xlu0 %v2600
    %v2602 = vpop.xlane.xlu0 %2601
    %v2603 = vsel %vm74, %v2589, 0.0
    %2604 = vadd.xlane.f32.xlu0 %v2603
    %v2605 = vpop.xlane.xlu0 %2604
    %v2606 = vsel %vm74, %v2590, 0.0
    %2607 = vadd.xlane.f32.xlu0 %v2606
    %v2608 = vpop.xlane.xlu0 %2607
    %v2609 = vsel %vm74, %v2591, 0.0
    %2610 = vadd.xlane.f32.xlu0 %v2609
    %v2611 = vpop.xlane.xlu0 %2610
    %v2612 = vsel %vm74, %v2592, 0.0
    %2613 = vadd.xlane.f32.xlu0 %v2612
    %v2614 = vpop.xlane.xlu0 %2613
    %v2615 = vsel %vm74, %v2593, 0.0
    %2616 = vadd.xlane.f32.xlu0 %v2615
    %v2617 = vpop.xlane.xlu0 %2616
    %v2618 = vmul.f32 %v2596, %v913
    %v2619 = vmul.f32 %v2599, %v913
    %v2620 = vmul.f32 %v2602, %v913
    %v2621 = vmul.f32 %v2605, %v913
    %v2622 = vmul.f32 %v2608, %v913
    %v2623 = vmul.f32 %v2611, %v913
    %v2624 = vmul.f32 %v2614, %v913
    %v2625 = vmul.f32 %v2617, %v913
    %v2626 = vsub.f32 %v2586, %v2618
    %v2627 = vsub.f32 %v2587, %v2619
    %v2628 = vsub.f32 %v2588, %v2620
    %v2629 = vsub.f32 %v2589, %v2621
    %v2630 = vsub.f32 %v2590, %v2622
    %v2631 = vsub.f32 %v2591, %v2623
    %v2632 = vsub.f32 %v2592, %v2624
    %v2633 = vsub.f32 %v2593, %v2625
    %v2634 = vmul.f32 %v2626, %v2626
    %v2635 = vmul.f32 %v2627, %v2627
    %v2636 = vmul.f32 %v2628, %v2628
    %v2637 = vmul.f32 %v2629, %v2629
    %v2638 = vmul.f32 %v2630, %v2630
    %v2639 = vmul.f32 %v2631, %v2631
    %v2640 = vmul.f32 %v2632, %v2632
    %v2641 = vmul.f32 %v2633, %v2633
    %v2642 = vsel %vm74, %v2634, 0.0
    %2643 = vadd.xlane.f32.xlu0 %v2642
    %v2644 = vpop.xlane.xlu0 %2643
    %v2645 = vsel %vm74, %v2635, 0.0
    %2646 = vadd.xlane.f32.xlu0 %v2645
    %v2647 = vpop.xlane.xlu0 %2646
    %v2648 = vsel %vm74, %v2636, 0.0
    %2649 = vadd.xlane.f32.xlu0 %v2648
    %v2650 = vpop.xlane.xlu0 %2649
    %v2651 = vsel %vm74, %v2637, 0.0
    %2652 = vadd.xlane.f32.xlu0 %v2651
    %v2653 = vpop.xlane.xlu0 %2652
    %v2654 = vsel %vm74, %v2638, 0.0
    %2655 = vadd.xlane.f32.xlu0 %v2654
    %v2656 = vpop.xlane.xlu0 %2655
    %v2657 = vsel %vm74, %v2639, 0.0
    %2658 = vadd.xlane.f32.xlu0 %v2657
    %v2659 = vpop.xlane.xlu0 %2658
    %v2660 = vsel %vm74, %v2640, 0.0
    %2661 = vadd.xlane.f32.xlu0 %v2660
    %v2662 = vpop.xlane.xlu0 %2661
    %v2663 = vsel %vm74, %v2641, 0.0
    %2664 = vadd.xlane.f32.xlu0 %v2663
    %v2665 = vpop.xlane.xlu0 %2664
    %v2666 = vmul.f32 %v2644, %v913
    %v2667 = vmul.f32 %v2647, %v913
    %v2668 = vmul.f32 %v2650, %v913
    %v2669 = vmul.f32 %v2653, %v913
    %v2670 = vmul.f32 %v2656, %v913
    %v2671 = vmul.f32 %v2659, %v913
    %v2672 = vmul.f32 %v2662, %v913
    %v2673 = vmul.f32 %v2665, %v913
    %v2674 = vadd.f32 %v2666, 1e-05
    %v2675 = vadd.f32 %v2667, 1e-05
    %v2676 = vadd.f32 %v2668, 1e-05
    %v2677 = vadd.f32 %v2669, 1e-05
    %v2678 = vadd.f32 %v2670, 1e-05
    %v2679 = vadd.f32 %v2671, 1e-05
    %v2680 = vadd.f32 %v2672, 1e-05
    %v2681 = vadd.f32 %v2673, 1e-05
    %v2682 = vrsqrt.pop %v2674
    %v2683 = vrsqrt.pop %v2675
    %v2684 = vrsqrt.pop %v2676
    %v2685 = vrsqrt.pop %v2677
    %v2686 = vrsqrt.pop %v2678
    %v2687 = vrsqrt.pop %v2679
    %v2688 = vrsqrt.pop %v2680
    %v2689 = vrsqrt.pop %v2681
    %v2690 = vmul.f32 %v2626, %v2682
    %v2691 = vmul.f32 %v2627, %v2683
    %v2692 = vmul.f32 %v2628, %v2684
    %v2693 = vmul.f32 %v2629, %v2685
    %v2694 = vmul.f32 %v2630, %v2686
    %v2695 = vmul.f32 %v2631, %v2687
    %v2696 = vmul.f32 %v2632, %v2688
    %v2697 = vmul.f32 %v2633, %v2689
    %v2698 = vld [vmem:[%s11] sm:$0x1]
    %v2700 = vlaneseq
    %v2701 = vshrl.u32 %v2700, 7
    %v2702 = vsub.s32 0, %v2701
    %v2703 = vrot.slane %v2698, %v2702
    %v2705 = vmul.f32 %v2690, %v2703
    %v2706 = vmul.f32 %v2691, %v2703
    %v2707 = vmul.f32 %v2692, %v2703
    %v2708 = vmul.f32 %v2693, %v2703
    %v2709 = vmul.f32 %v2694, %v2703
    %v2710 = vmul.f32 %v2695, %v2703
    %v2711 = vmul.f32 %v2696, %v2703
    %v2712 = vmul.f32 %v2697, %v2703
    %v2713 = vsel %vm74, %v2705, 0.0
    %2714 = vadd.xlane.f32.xlu0 %v2713
    %v2715 = vpop.xlane.xlu0 %2714
    %v2716 = vsel %vm74, %v2706, 0.0
    %2717 = vadd.xlane.f32.xlu0 %v2716
    %v2718 = vpop.xlane.xlu0 %2717
    %v2719 = vsel %vm74, %v2707, 0.0
    %2720 = vadd.xlane.f32.xlu0 %v2719
    %v2721 = vpop.xlane.xlu0 %2720
    %v2722 = vsel %vm74, %v2708, 0.0
    %2723 = vadd.xlane.f32.xlu0 %v2722
    %v2724 = vpop.xlane.xlu0 %2723
    %v2725 = vsel %vm74, %v2709, 0.0
    %2726 = vadd.xlane.f32.xlu0 %v2725
    %v2727 = vpop.xlane.xlu0 %2726
    %v2728 = vsel %vm74, %v2710, 0.0
    %2729 = vadd.xlane.f32.xlu0 %v2728
    %v2730 = vpop.xlane.xlu0 %2729
    %v2731 = vsel %vm74, %v2711, 0.0
    %2732 = vadd.xlane.f32.xlu0 %v2731
    %v2733 = vpop.xlane.xlu0 %2732
    %v2734 = vsel %vm74, %v2712, 0.0
    %2735 = vadd.xlane.f32.xlu0 %v2734
    %v2736 = vpop.xlane.xlu0 %2735
    %s2737 = sld [smem:[#allocation2]]
    %v2738 = vstv %s2737
    %v2739 = vadd.f32 %v2715, %v2738
    %v2740 = vadd.f32 %v2718, %v2738
    %v2741 = vadd.f32 %v2721, %v2738
    %v2742 = vadd.f32 %v2724, %v2738
    %v2743 = vadd.f32 %v2727, %v2738
    %v2744 = vadd.f32 %v2730, %v2738
    %v2745 = vadd.f32 %v2733, %v2738
    %v2746 = vadd.f32 %v2736, %v2738
    %vm2747 = vcmask 7168
    %2748 = vst.msk [vmem:[%s13] sm:$0xff] %vm2747, %v2739
    %2749 = vst.msk [vmem:[%s13 + $0x8] sm:$0xff] %vm2747, %v2740
    %2750 = vst.msk [vmem:[%s13 + $0x10] sm:$0xff] %vm2747, %v2741
    %2751 = vst.msk [vmem:[%s13 + $0x18] sm:$0xff] %vm2747, %v2742
    %2752 = vst.msk [vmem:[%s13 + $0x20] sm:$0xff] %vm2747, %v2743
    %2753 = vst.msk [vmem:[%s13 + $0x28] sm:$0xff] %vm2747, %v2744
    %2754 = vst.msk [vmem:[%s13 + $0x30] sm:$0xff] %vm2747, %v2745
    %2755 = vst.msk [vmem:[%s13 + $0x38] sm:$0xff] %vm2747, %v2746
    // Predicated region
    $region58: #{transformer_combination_forward.1} parent=1 // pred_check
      _
    $region59: #{transformer_combination_forward.1} parent=1 // pred_check_branch
      %2757 = sbr.rel (0) target = $region61
    $region60: #{transformer_combination_forward.1} parent=1 // pred_region
      _
    $region61: #{transformer_combination_forward.1} parent=1 // pred_fallthru
      _
    // Predicated region
    $region62: #{transformer_combination_forward.1} parent=1 // pred_check
      _
    $region63: #{transformer_combination_forward.1} parent=1 // pred_check_branch
      %2759 = sbr.rel (0) target = $region65
    $region64: #{transformer_combination_forward.1} parent=1 // pred_region
      _
    $region65: #{transformer_combination_forward.1} parent=1 // pred_fallthru
      _
    %2760 = vsyncpa [#allocation4], 1

</llo_original>
